<compile_context>
chip_gen: v5e
topology: v5e:2x2
jax: 0.10.0
libtpu: 0.0.40
codegen_flags: <defaults>
</compile_context>

<pallas_src>
import functools

import jax
import jax.numpy as jnp
from jax import lax
from jax.experimental import pallas as pl
from jax.experimental.pallas import tpu as pltpu

_MB = 1024 * 1024


def _round_up(x, m):
    return (x + m - 1) // m * m


def _generation_config():
    """Best-effort TPU-generation-aware tiling / VMEM defaults."""
    kind = ""
    try:
        kind = jax.devices()[0].device_kind.lower()
    except Exception:
        pass
    if "v7" in kind or "7x" in kind:
        # 64 MiB VMEM per TensorCore -> leave headroom below the physical cap.
        cfg = dict(tm=256, tco=256, vmem=40 * _MB)
    elif "v6" in kind:
        # 128 MiB VMEM, 2x256x256 MXU -> large tiles amortize per-step overhead.
        cfg = dict(tm=512, tco=256, vmem=96 * _MB)
    elif "v5" in kind:
        # v5e: 4x128x128 MXU, single vst slot -> 128-aligned lane tiles.
        cfg = dict(tm=256, tco=128, vmem=64 * _MB)
    else:
        # Unknown generation: conservative (v7x-like) limits.
        cfg = dict(tm=256, tco=256, vmem=40 * _MB)
    # Clamp the scoped VMEM request against the reported physical capacity.
    try:
        cap = pltpu.get_tpu_info().vmem_capacity_bytes
        cfg["vmem"] = min(cfg["vmem"], int(cap * 0.6))
    except Exception:
        pass
    return cfg


def _conv_relu_kernel(x_ref, w_ref, b_ref, o_ref, *,
                      kh, kw, wp, tm, halo, cin, fold_taps):
    # x_ref: (R_in, Cin)        whole flattened (row-padded) image, this batch elem
    # w_ref: (KH*KW*Cin, TCO)   reshaped weights for this Cout tile
    # b_ref: (1, TCO)           bias slice (f32) for this Cout tile
    # o_ref: (TM, TCO)          lane-dense output tile (flattened h*wp + w rows)
    m0 = pl.multiple_of(pl.program_id(2) * tm, 128)

    # One aligned dynamic load of the window this tile needs; every conv tap is
    # a static sublane-offset slice of it (i*wp is sublane-aligned by design).
    xw = x_ref[pl.ds(m0, tm + halo), :]                        # (TM+halo, Cin)

    if fold_taps:
        # im2col tile: fold all KH*KW taps into the contraction dim -> one
        # MXU matmul with K = KH*KW*Cin.
        taps = [xw[i * wp + j: i * wp + j + tm, :]
                for i in range(kh) for j in range(kw)]
        patch = taps[0] if len(taps) == 1 else jnp.concatenate(taps, axis=-1)
        acc = jnp.dot(patch, w_ref[...], preferred_element_type=jnp.float32)
    else:
        # Large Cin: skip the im2col lane-concat (multi-MB VMEM copy); per-tap
        # K=Cin matmuls are already MXU-efficient and sum into one f32 acc.
        acc = jnp.zeros((tm, o_ref.shape[-1]), jnp.float32)
        for i in range(kh):
            for j in range(kw):
                t = i * kw + j
                acc = acc + jnp.dot(
                    xw[i * wp + j: i * wp + j + tm, :],
                    w_ref[t * cin:(t + 1) * cin, :],
                    preferred_element_type=jnp.float32)

    o_ref[...] = jnp.maximum(acc + b_ref[...], 0.0).astype(o_ref.dtype)


def conv_relu_nhwc(x_nhwc, w_hwio, bias, padding, *,
                   tm_target=None, tco_target=None,
                   accum_cin_threshold=256,
                   small_cin_fallback=True, small_cin=16):
    """Conv2d (stride 1, symmetric zero padding) + ReLU on NHWC input."""
    N, H, W, Cin = x_nhwc.shape
    KH, KW, wcin, Cout = w_hwio.shape
    assert wcin == Cin

    if small_cin_fallback and Cin < small_cin:
        # Stem-like layers: lane padding to 128 would waste ~128/Cin of
        # VMEM/DMA -> use XLA conv (the layer is pure data movement anyway).
        y = lax.conv_general_dilated(
            x_nhwc, w_hwio, window_strides=(1, 1),
            padding=((padding, padding), (padding, padding)),
            dimension_numbers=("NHWC", "HWIO", "NHWC"))
        return jnp.maximum(y + bias.reshape(1, 1, 1, -1), 0.0).astype(x_nhwc.dtype)

    cfg = _generation_config()
    tm_target = cfg["tm"] if tm_target is None else tm_target
    tco_target = cfg["tco"] if tco_target is None else tco_target
    vmem_limit = cfg["vmem"]

    dt = x_nhwc.dtype
    itemsize = jnp.dtype(dt).itemsize
    sub = max(8, 32 // itemsize)               # sublane pack: 8 f32 / 16 bf16

    Hp, Wp = H + 2 * padding, W + 2 * padding
    Ho, Wo = Hp - KH + 1, Wp - KW + 1
    wp_pad = _round_up(Wp, sub)                # aligned flattened row stride

    # ---- Cout lane handling: pad only when the writeback overhead is <= 2x ----
    if Cout % 128 == 0 or Cout >= 64:
        Cout_p = _round_up(Cout, 128)
    else:
        Cout_p = Cout                          # tiny Cout: masked stores beat 128/Cout HBM
    K2C = KH * KW * Cin
    w2 = w_hwio.reshape(K2C, Cout)
    b2 = bias
    if Cout_p != Cout:
        w2 = jnp.pad(w2, ((0, 0), (0, Cout_p - Cout)))
        b2 = jnp.pad(b2, (0, Cout_p - Cout))
    b2 = b2.reshape(1, Cout_p).astype(jnp.float32)

    if Cout_p % tco_target == 0:
        tco = tco_target
    elif Cout_p % 128 == 0:
        tco = 128
    else:
        tco = Cout_p
    n_co = Cout_p // tco

    # ---- row tiling: M = flattened output rows (garbage cols w >= Wo stripped) ----
    M = Ho * wp_pad
    n_m = max(1, pl.cdiv(M, tm_target))
    tm = _round_up(pl.cdiv(M, n_m), 128)       # multiple of 128 -> full MXU passes
    M_pad = n_m * tm
    halo = _round_up((KH - 1) * wp_pad + (KW - 1), sub)

    # ---- input layout: ONE fused pad pass (spatial pad + row stride + tail) ----
    R_need = max(M_pad + halo, Hp * wp_pad)
    Hr = pl.cdiv(R_need, wp_pad)               # total padded rows of width wp_pad
    R_in = Hr * wp_pad                         # multiple of wp_pad (hence of sub)
    x2 = jnp.pad(x_nhwc, ((0, 0),
                          (padding, Hr - H - padding),
                          (padding, wp_pad - W - padding),
                          (0, 0)))
    x2 = x2.reshape(N, R_in, Cin)

    fold_taps = Cin < accum_cin_threshold
    kernel = functools.partial(_conv_relu_kernel, kh=KH, kw=KW, wp=wp_pad,
                               tm=tm, halo=halo, cin=Cin, fold_taps=fold_taps)

    # Single-buffer the whole-image slab when double-buffering it would dominate
    # the VMEM budget (its block index only changes once per batch element).
    slab_bytes = R_in * _round_up(Cin, 128) * itemsize
    x_spec_kwargs = {}
    if 2 * slab_bytes > vmem_limit // 3:
        x_spec_kwargs["pipeline_mode"] = pl.Buffered(1)
    x_spec = pl.BlockSpec((None, R_in, Cin), lambda n, co, m: (n, 0, 0),
                          **x_spec_kwargs)

    flops = 2 * N * M_pad * K2C * Cout_p       # actual kernel work (incl. garbage cols)
    bytes_accessed = int(N * R_in * Cin * itemsize
                         + N * n_co * K2C * tco * jnp.dtype(w2.dtype).itemsize
                         + N * n_co * tco * 4
                         + N * M_pad * Cout_p * itemsize)

    out = pl.pallas_call(
        kernel,
        out_shape=jax.ShapeDtypeStruct((N, M_pad, Cout_p), dt),
        grid_spec=pltpu.PrefetchScalarGridSpec(
            num_scalar_prefetch=0,
            grid=(N, n_co, n_m),
            in_specs=[
                x_spec,                                            # image slab
                pl.BlockSpec((K2C, tco), lambda n, co, m: (0, co)),  # weights
                pl.BlockSpec((1, tco), lambda n, co, m: (0, co)),    # bias
            ],
            out_specs=pl.BlockSpec((None, tm, tco), lambda n, co, m: (n, m, co)),
        ),
        compiler_params=pltpu.CompilerParams(
            dimension_semantics=("parallel", "parallel", "parallel"),
            vmem_limit_bytes=vmem_limit,
        ),
        cost_estimate=pl.CostEstimate(flops=flops, transcendentals=0,
                                      bytes_accessed=bytes_accessed),
    )(x2, w2, b2)

    # Strip row padding + garbage columns + Cout padding, back to NHWC.
    out = out[:, :M, :Cout].reshape(N, Ho, wp_pad, Cout)[:, :, :Wo, :]
    return out


def conv_relu_nchw(x_nchw, w_oihw, bias, padding, **kwargs):
    """PyTorch-convention entry point: NCHW input, OIHW weights.

    In a real UNet keep activations NHWC across layers and transpose weights
    once at load time; these transposes only exist to match the nn.Module API.
    """
    x_nhwc = jnp.transpose(x_nchw, (0, 2, 3, 1))
    w_hwio = jnp.transpose(w_oihw, (2, 3, 1, 0))
    y_nhwc = conv_relu_nhwc(x_nhwc, w_hwio, bias, padding, **kwargs)
    return jnp.transpose(y_nhwc, (0, 3, 1, 2))


def _reference_nchw(x, w, b, padding):
    y = lax.conv_general_dilated(
        x.astype(jnp.float32), w.astype(jnp.float32),
        window_strides=(1, 1), padding=((padding, padding), (padding, padding)),
        dimension_numbers=("NCHW", "OIHW", "NCHW"))
    return jnp.maximum(y + b.astype(jnp.float32)[None, :, None, None], 0.0)


if __name__ == "__main__":
    key = jax.random.PRNGKey(0)

    def make_inputs(k, N, Cin, H, W, Cout, K, dtype):
        kx, kw_, kb = jax.random.split(k, 3)
        x = jax.random.normal(kx, (N, Cin, H, W), dtype=jnp.float32)
        w = jax.random.normal(kw_, (Cout, Cin, K, K), dtype=jnp.float32) * 0.1
        b = jax.random.normal(kb, (Cout,), dtype=jnp.float32) * 0.1
        return x.astype(dtype), w.astype(dtype), b.astype(dtype)

    cases = [
        # (N, Cin, H, W, Cout, K, P, dtype, atol, rtol, kwargs)
        # Spec-sized stem layer: tiny Cin -> dispatched to the XLA-conv fallback.
        (2, 4, 16, 16, 8, 3, 1, jnp.float32, 2e-3, 2e-3, {}),
        # Same shape forced through the Pallas kernel (original module config).
        (2, 4, 16, 16, 8, 3, 1, jnp.float32, 2e-3, 2e-3,
         {"small_cin_fallback": False}),
        # Mid-size layer: lane-concat im2col path (single big-K matmul).
        (2, 32, 16, 16, 64, 3, 1, jnp.float32, 2e-3, 2e-3, {}),
        # 1x1 conv, no padding.
        (1, 32, 16, 16, 64, 1, 0, jnp.float32, 2e-3, 2e-3, {}),
        # Deep layer, bf16: per-tap accumulate path (no im2col concat).
        (1, 256, 8, 8, 128, 3, 1, jnp.bfloat16, 1e-1, 5e-2, {}),
    ]

    for idx, (N, Cin, H, W, Cout, K, P, dtype, atol, rtol, kwargs) in enumerate(cases):
        key, subkey = jax.random.split(key)
        x, w, b = make_inputs(subkey, N, Cin, H, W, Cout, K, dtype)
        y = jax.block_until_ready(conv_relu_nchw(x, w, b, P, **kwargs))
        y_ref = _reference_nchw(x, w, b, P)
        assert y.shape == y_ref.shape, (idx, y.shape, y_ref.shape)
        err = float(jnp.max(jnp.abs(y.astype(jnp.float32) - y_ref)))
        assert jnp.allclose(y.astype(jnp.float32), y_ref, atol=atol, rtol=rtol), (
            f"case {idx}: mismatch vs reference (max abs err {err})")

    print("KERNEL_OK")
</pallas_src>

<mosaic_0001>
module attributes {stable_mosaic.version = 11 : i64} {
  func.func @_conv_relu_kernel(%arg0: i32, %arg1: i32, %arg2: i32, %arg3: memref<1x576x4xf32, #tpu.memory_space<vmem>>, %arg4: memref<36x8xf32, #tpu.memory_space<vmem>>, %arg5: memref<1x8xf32, #tpu.memory_space<vmem>>, %arg6: memref<1x256x8xf32, #tpu.memory_space<vmem>>) attributes {dimension_semantics = [#tpu.dimension_semantics<parallel>, #tpu.dimension_semantics<parallel>, #tpu.dimension_semantics<parallel>], iteration_bounds = array<i64: 2, 1, 2>, scalar_prefetch = 0 : i64, scratch_operands = 0 : i64, tpu.core_type = #tpu.core_type<tc>, window_params = [{transform_indices = @transform_0, window_bounds = array<i64: 1, 576, 4>}, {transform_indices = @transform_1, window_bounds = array<i64: 36, 8>}, {transform_indices = @transform_2, window_bounds = array<i64: 1, 8>}, {transform_indices = @transform_3, window_bounds = array<i64: 1, 256, 8>}]} {
    %c256_i32 = arith.constant 256 : i32
    %0 = arith.muli %arg2, %c256_i32 : i32
    %1 = tpu.assume_multiple %0, 128 : i32
    %c0 = arith.constant 0 : index
    %2 = arith.index_cast %1 : i32 to index
    %c0_0 = arith.constant 0 : index
    %3 = vector.load %arg3[%c0, %2, %c0_0] : memref<1x576x4xf32, #tpu.memory_space<vmem>>, vector<1x312x4xf32>
    %4 = vector.shape_cast %3 : vector<1x312x4xf32> to vector<312x4xf32>
    %5 = vector.extract_strided_slice %4 {offsets = [0, 0], sizes = [256, 4], strides = [1, 1]} : vector<312x4xf32> to vector<256x4xf32>
    %6 = vector.extract_strided_slice %4 {offsets = [1, 0], sizes = [256, 4], strides = [1, 1]} : vector<312x4xf32> to vector<256x4xf32>
    %7 = vector.extract_strided_slice %4 {offsets = [2, 0], sizes = [256, 4], strides = [1, 1]} : vector<312x4xf32> to vector<256x4xf32>
    %8 = vector.extract_strided_slice %4 {offsets = [24, 0], sizes = [256, 4], strides = [1, 1]} : vector<312x4xf32> to vector<256x4xf32>
    %9 = vector.extract_strided_slice %4 {offsets = [25, 0], sizes = [256, 4], strides = [1, 1]} : vector<312x4xf32> to vector<256x4xf32>
    %10 = vector.extract_strided_slice %4 {offsets = [26, 0], sizes = [256, 4], strides = [1, 1]} : vector<312x4xf32> to vector<256x4xf32>
    %11 = vector.extract_strided_slice %4 {offsets = [48, 0], sizes = [256, 4], strides = [1, 1]} : vector<312x4xf32> to vector<256x4xf32>
    %12 = vector.extract_strided_slice %4 {offsets = [49, 0], sizes = [256, 4], strides = [1, 1]} : vector<312x4xf32> to vector<256x4xf32>
    %13 = vector.extract_strided_slice %4 {offsets = [50, 0], sizes = [256, 4], strides = [1, 1]} : vector<312x4xf32> to vector<256x4xf32>
    %14 = tpu.concatenate %5, %6, %7, %8, %9, %10, %11, %12, %13 in 1 : vector<256x4xf32>, vector<256x4xf32>, vector<256x4xf32>, vector<256x4xf32>, vector<256x4xf32>, vector<256x4xf32>, vector<256x4xf32>, vector<256x4xf32>, vector<256x4xf32> -> vector<256x36xf32>
    %c0_1 = arith.constant 0 : index
    %c0_2 = arith.constant 0 : index
    %15 = vector.load %arg4[%c0_1, %c0_2] : memref<36x8xf32, #tpu.memory_space<vmem>>, vector<36x8xf32>
    %cst = arith.constant dense<0.000000e+00> : vector<256x8xf32>
    %16 = tpu.matmul %14, %15, %cst {dimension_numbers = #tpu.dot_dimension_numbers<[1], [0], [0], [1], [0, 0, 1, 1], [], []>} : vector<256x36xf32>, vector<36x8xf32>, vector<256x8xf32> -> vector<256x8xf32>
    %c0_3 = arith.constant 0 : index
    %c0_4 = arith.constant 0 : index
    %17 = vector.load %arg5[%c0_3, %c0_4] : memref<1x8xf32, #tpu.memory_space<vmem>>, vector<1x8xf32>
    %18 = vector.broadcast %17 : vector<1x8xf32> to vector<256x8xf32>
    %19 = arith.addf %16, %18 : vector<256x8xf32>
    %cst_5 = arith.constant 0.000000e+00 : f32
    %20 = vector.broadcast %cst_5 : f32 to vector<256x8xf32>
    %21 = arith.maximumf %19, %20 : vector<256x8xf32>
    %c0_6 = arith.constant 0 : index
    %c0_7 = arith.constant 0 : index
    %c0_8 = arith.constant 0 : index
    %22 = vector.load %arg6[%c0_6, %c0_7, %c0_8] : memref<1x256x8xf32, #tpu.memory_space<vmem>>, vector<1x256x8xf32>
    %23 = vector.shape_cast %22 : vector<1x256x8xf32> to vector<256x8xf32>
    %24 = vector.shape_cast %21 : vector<256x8xf32> to vector<1x256x8xf32>
    tpu.vector_store %arg6[%c0_6, %c0_7, %c0_8], %24 {strides = array<i32>} : memref<1x256x8xf32, #tpu.memory_space<vmem>>, vector<1x256x8xf32>,
    return
  }
  func.func @transform_0(%arg0: i32, %arg1: i32, %arg2: i32) -> (i32, i32, i32) {
    %c0_i32 = arith.constant 0 : i32
    %c0_i32_0 = arith.constant 0 : i32
    %c0_i32_1 = arith.constant 0 : i32
    return %arg0, %c0_i32, %c0_i32_0 : i32, i32, i32
  }
  func.func @transform_1(%arg0: i32, %arg1: i32, %arg2: i32) -> (i32, i32) {
    %c0_i32 = arith.constant 0 : i32
    %c0_i32_0 = arith.constant 0 : i32
    return %c0_i32, %arg1 : i32, i32
  }
  func.func @transform_2(%arg0: i32, %arg1: i32, %arg2: i32) -> (i32, i32) {
    %c0_i32 = arith.constant 0 : i32
    %c0_i32_0 = arith.constant 0 : i32
    return %c0_i32, %arg1 : i32, i32
  }
  func.func @transform_3(%arg0: i32, %arg1: i32, %arg2: i32) -> (i32, i32, i32) {
    %c0_i32 = arith.constant 0 : i32
    return %arg0, %arg2, %arg1 : i32, i32, i32
  }
}

</mosaic_0001>

<llo_original>
// kernel: tpu_custom_call.1
$region0: #{tpu_custom_call.1}
  #allocation0 [shape = 'u32[]', space=smem, size = 0x4, offset = 0x4, fixed_abs, tag = 'smem constant byte address 0x4 - core index']
  #allocation1 [shape = 'u32[72,128]{1,0:T(1,128)}', space=vmem, size = 0x9000, scoped, tag = 'internal scratch']
  %s0 = inlined_call_operand.vmem [shape: f32[2,576,4], index: 0, kind: input, shape index: {}]
  %s1 = inlined_call_operand.vmem [shape: f32[36,8], index: 1, kind: input, shape index: {}]
  %s2 = inlined_call_operand.vmem [shape: f32[1,8], index: 2, kind: input, shape index: {}]
  %s3 = inlined_call_operand.vmem [shape: f32[2,512,8], index: 3, kind: output, shape index: {}]
  %s4 = sld [smem:[#allocation0]]
  $region45: #{tpu_custom_call.1} parent=0
    _
  %s6 = ssub.s32 1, %s4
  %s7 = scalar_select 0, %s6, %s4
  loop: start=0, step=1, limit=6
  $region2: #{tpu_custom_call.1} parent=0 // loop_pre_header
    _
  $region3: #{tpu_custom_call.1} parent=0 // loop_header
    %s9 = sphi 0, %s13
    %p10 = scmp.ge.s32.totalorder %s9, 6
    %s16 = sphi 0, %s35
    %s17 = sphi 0, %s31
    %s18 = sphi 0, %s27
    %s19 = sphi 0, %s16
    %s20 = sphi 0, %s17
    %s21 = sphi 0, %s18
    %s22 = sphi 0, %s19
    %s23 = sphi 0, %s20
    %s24 = sphi 0, %s21
    %s38 = sphi 0, %s40
    %s41 = sphi 0, %s38
    %s42 = sphi 0, %s41
    %s58 = sphi 0, %s42
    %s64 = sphi 0, %s66
    %s67 = sphi 0, %s64
    %s68 = sphi 0, %s67
    %s84 = sphi 0, %s68
    %s90 = sphi 0, %s92
    %s93 = sphi 0, %s90
    %s94 = sphi 0, %s93
    %s110 = sphi 0, %s94
    %s120 = sphi 0, %s122
    %s123 = sphi 0, %s120
    %s124 = sphi 0, %s123
    %s140 = sphi 0, %s124
  $region4: #{tpu_custom_call.1} parent=0 // loop_header_branch
    %12 = sbr.rel (%p10) target = $region8
  $region5: #{tpu_custom_call.1} parent=0 // loop_body
    %s14 = ssub.s32 %s9, 1
    %s15 = ssub.s32 %s9, 2
    %s25 = sadd.s32 1, %s18
    %p26 = scmp.ge.s32.totalorder %s25, 2
    %s27 = scalar_select %p26, 0, %s25
    %s28 = sadd.s32 1, %s17
    %s29 = scalar_select %p26, %s28, %s17
    %p30 = scmp.ge.s32.totalorder %s29, 1
    %s31 = scalar_select %p30, 0, %s29
    %s32 = sadd.s32 1, %s16
    %s33 = scalar_select %p30, %s32, %s16
    %p34 = scmp.ge.s32.totalorder %s33, 2
    %s35 = scalar_select %p34, 0, %s33
    %s36 = ssub.s32 %s16, %s35
    %p37 = scmp.eq.s32.totalorder %s36, 0
    %s39 = sadd.s32 %s38, 1
    %s40 = scalar_select %p37, %s38, %s39
    %p43 = pneg %p37
    %p44 = scmp.eq.s32.totalorder %s9, 3
    %p45 = por %p43, %p44
    %p46 = scmp.ne.s32.totalorder %s38, %s41
    %p47 = scmp.eq.s32.totalorder %s9, 0
    %p48 = por %p46, %p47
    %p49 = scmp.ne.s32.totalorder %s38, %s41
    %p50 = scmp.eq.s32.totalorder %s14, 3
    %p51 = por %p49, %p50
    %p52 = scmp.ne.s32.totalorder %s41, %s42
    %p53 = scmp.eq.s32.totalorder %s14, 0
    %p54 = por %p52, %p53
    %p55 = scmp.ne.s32.totalorder %s41, %s42
    %p56 = scmp.eq.s32.totalorder %s15, 3
    %p57 = por %p55, %p56
    %p59 = scmp.ne.s32.totalorder %s42, %s58
    %p60 = scmp.eq.s32.totalorder %s15, 0
    %p61 = por %p59, %p60
    %s62 = ssub.s32 %s17, %s31
    %p63 = scmp.eq.s32.totalorder %s62, 0
    %s65 = sadd.s32 %s64, 1
    %s66 = scalar_select %p63, %s64, %s65
    %p69 = pneg %p63
    %p70 = scmp.eq.s32.totalorder %s9, 3
    %p71 = por %p69, %p70
    %p72 = scmp.ne.s32.totalorder %s64, %s67
    %p73 = scmp.eq.s32.totalorder %s9, 0
    %p74 = por %p72, %p73
    %p75 = scmp.ne.s32.totalorder %s64, %s67
    %p76 = scmp.eq.s32.totalorder %s14, 3
    %p77 = por %p75, %p76
    %p78 = scmp.ne.s32.totalorder %s67, %s68
    %p79 = scmp.eq.s32.totalorder %s14, 0
    %p80 = por %p78, %p79
    %p81 = scmp.ne.s32.totalorder %s67, %s68
    %p82 = scmp.eq.s32.totalorder %s15, 3
    %p83 = por %p81, %p82
    %p85 = scmp.ne.s32.totalorder %s68, %s84
    %p86 = scmp.eq.s32.totalorder %s15, 0
    %p87 = por %p85, %p86
    %s88 = ssub.s32 %s17, %s31
    %p89 = scmp.eq.s32.totalorder %s88, 0
    %s91 = sadd.s32 %s90, 1
    %s92 = scalar_select %p89, %s90, %s91
    %p95 = pneg %p89
    %p96 = scmp.eq.s32.totalorder %s9, 3
    %p97 = por %p95, %p96
    %p98 = scmp.ne.s32.totalorder %s90, %s93
    %p99 = scmp.eq.s32.totalorder %s9, 0
    %p100 = por %p98, %p99
    %p101 = scmp.ne.s32.totalorder %s90, %s93
    %p102 = scmp.eq.s32.totalorder %s14, 3
    %p103 = por %p101, %p102
    %p104 = scmp.ne.s32.totalorder %s93, %s94
    %p105 = scmp.eq.s32.totalorder %s14, 0
    %p106 = por %p104, %p105
    %p107 = scmp.ne.s32.totalorder %s93, %s94
    %p108 = scmp.eq.s32.totalorder %s15, 3
    %p109 = por %p107, %p108
    %p111 = scmp.ne.s32.totalorder %s94, %s110
    %p112 = scmp.eq.s32.totalorder %s15, 0
    %p113 = por %p111, %p112
    %s114 = ssub.s32 %s16, %s35
    %s115 = ssub.s32 %s18, %s27
    %s116 = sor.u32 %s114, %s115
    %s117 = ssub.s32 %s17, %s31
    %s118 = sor.u32 %s116, %s117
    %p119 = scmp.eq.s32.totalorder %s118, 0
    %s121 = sadd.s32 %s120, 1
    %s122 = scalar_select %p119, %s120, %s121
    %p125 = pneg %p119
    %p126 = scmp.eq.s32.totalorder %s9, 3
    %p127 = por %p125, %p126
    %p128 = scmp.ne.s32.totalorder %s120, %s123
    %p129 = scmp.eq.s32.totalorder %s9, 0
    %p130 = por %p128, %p129
    %p131 = scmp.ne.s32.totalorder %s120, %s123
    %p132 = scmp.eq.s32.totalorder %s14, 3
    %p133 = por %p131, %p132
    %p134 = scmp.ne.s32.totalorder %s123, %s124
    %p135 = scmp.eq.s32.totalorder %s14, 0
    %p136 = por %p134, %p135
    %p137 = scmp.ne.s32.totalorder %s123, %s124
    %p138 = scmp.eq.s32.totalorder %s15, 3
    %p139 = por %p137, %p138
    %p141 = scmp.ne.s32.totalorder %s124, %s140
    %p142 = scmp.eq.s32.totalorder %s15, 0
    %p143 = por %p141, %p142
    %p144 = scmp.le.s32.totalorder 1, %s9
    %p145 = scmp.lt.s32.totalorder %s9, 5
    %p146 = pnand %p144, %p145
    %p147 = pneg %p146
    // Predicated region
    $region9: #{tpu_custom_call.1} parent=5 // pred_check
      _
    $region10: #{tpu_custom_call.1} parent=5 // pred_check_branch
      %149 = sbr.rel (%p146) target = $region12
    $region11: #{tpu_custom_call.1} parent=5 // pred_region
      %s150 = ssub.s32 %s9, 1
      // Predicated region
      $region13: #{tpu_custom_call.1} parent=11 // pred_check
        %p151 = pneg %p80
      $region14: #{tpu_custom_call.1} parent=11 // pred_check_branch
        %153 = sbr.rel (%p151) target = $region16
      $region15: #{tpu_custom_call.1} parent=11 // pred_region
        %p154 = scmp.lt.s32.totalorder %s20, 0
        %s155 = scalar_select %p154, %s20, 0
        %s156 = smul.addr %s155, 8
        %s157 = scalar_lea.vmem %s1, %s156
      $region16: #{tpu_custom_call.1} parent=11 // pred_fallthru
        _
      // Predicated region
      $region17: #{tpu_custom_call.1} parent=11 // pred_check
        %p158 = pneg %p106
      $region18: #{tpu_custom_call.1} parent=11 // pred_check_branch
        %160 = sbr.rel (%p158) target = $region20
      $region19: #{tpu_custom_call.1} parent=11 // pred_region
        %p161 = scmp.lt.s32.totalorder %s20, 0
        %s162 = scalar_select %p161, %s20, 0
        %s163 = scalar_lea.vmem %s2, %s162
      $region20: #{tpu_custom_call.1} parent=11 // pred_fallthru
        _
    $region12: #{tpu_custom_call.1} parent=5 // pred_fallthru
      _
    %p164 = scmp.lt.s32.totalorder %s9, 4
    // Predicated region
    $region21: #{tpu_custom_call.1} parent=5 // pred_check
      %p165 = pneg %p164
    $region22: #{tpu_custom_call.1} parent=5 // pred_check_branch
      %167 = sbr.rel (%p165) target = $region24
    $region23: #{tpu_custom_call.1} parent=5 // pred_region
      // Predicated region
      $region25: #{tpu_custom_call.1} parent=23 // pred_check
        %p168 = pneg %p48
      $region26: #{tpu_custom_call.1} parent=23 // pred_check_branch
        %170 = sbr.rel (%p168) target = $region28
      $region27: #{tpu_custom_call.1} parent=23 // pred_region
        %p171 = scmp.lt.s32.totalorder %s16, 1
        %s172 = scalar_select %p171, %s16, 1
        %s173 = smul.addr %s172, 72
        %s174 = smul.addr %s173, 8
        %s175 = scalar_lea.vmem %s0, %s174
      $region28: #{tpu_custom_call.1} parent=23 // pred_fallthru
        _
    $region24: #{tpu_custom_call.1} parent=5 // pred_fallthru
      _
    %p176 = scmp.le.s32.totalorder 1, %s9
    %p177 = scmp.lt.s32.totalorder %s9, 5
    %p178 = pnand %p176, %p177
    %p179 = pneg %p178
    // Predicated region
    $region29: #{tpu_custom_call.1} parent=5 // pred_check
      _
    $region30: #{tpu_custom_call.1} parent=5 // pred_check_branch
      %181 = sbr.rel (%p178) target = $region32
    $region31: #{tpu_custom_call.1} parent=5 // pred_region
      %s182 = ssub.s32 %s9, 1
      %p183 = scmp.lt.s32.totalorder %s19, 1
      %s184 = scalar_select %p183, %s19, 1
      %s185 = smul.addr %s184, 72
      %s186 = smul.addr %s185, 8
      %s187 = scalar_lea.vmem %s0, %s186
      %p188 = pneg %p54
      %p189 = pneg %p51
      %p190 = scmp.lt.s32.totalorder %s20, 0
      %s191 = scalar_select %p190, %s20, 0
      %s192 = smul.addr %s191, 8
      %s193 = scalar_lea.vmem %s1, %s192
      %p194 = pneg %p80
      %p195 = pneg %p77
      %p196 = scmp.lt.s32.totalorder %s20, 0
      %s197 = scalar_select %p196, %s20, 0
      %s198 = scalar_lea.vmem %s2, %s197
      %p199 = pneg %p106
      %p200 = pneg %p103
      %p201 = pneg %p136
      %p202 = pneg %p133
      %s203 = smul.u32 32, %s21
      %p204 = scmp.lt.s32.totalorder %s19, 1
      %s205 = scalar_select %p204, %s19, 1
      %p206 = scmp.lt.s32.totalorder %s203, 63
      %s207 = scalar_select %p206, %s203, 63
      %p208 = scmp.lt.s32.totalorder %s20, 0
      %s209 = scalar_select %p208, %s20, 0
      %s210 = sadd.s32 %s209, %s207
      %s211 = smul.addr %s205, 64
      %s212 = sadd.s32 %s210, %s211
      %s213 = smul.addr %s212, 8
      %s214 = scalar_lea.vmem %s3, %s213
      %p215 = scmp.lt.s32.totalorder %s19, 1
      %s216 = scalar_select %p215, %s19, 1
      %s217 = smul.addr %s216, 72
      %s218 = smul.addr %s217, 8
      %s219 = scalar_lea.vmem %s0, %s218
      %p220 = scmp.lt.s32.totalorder %s20, 0
      %s221 = scalar_select %p220, %s20, 0
      %s222 = smul.addr %s221, 8
      %s223 = scalar_lea.vmem %s1, %s222
      %p224 = scmp.lt.s32.totalorder %s20, 0
      %s225 = scalar_select %p224, %s20, 0
      %s226 = scalar_lea.vmem %s2, %s225
      %s227 = smul.u32 32, %s21
      %p228 = scmp.lt.s32.totalorder %s19, 1
      %s229 = scalar_select %p228, %s19, 1
      %p230 = scmp.lt.s32.totalorder %s227, 63
      %s231 = scalar_select %p230, %s227, 63
      %p232 = scmp.lt.s32.totalorder %s20, 0
      %s233 = scalar_select %p232, %s20, 0
      %s234 = sadd.s32 %s233, %s231
      %s235 = smul.addr %s229, 64
      %s236 = sadd.s32 %s234, %s235
      %s237 = smul.addr %s236, 8
      %s238 = scalar_lea.vmem %s3, %s237
      %s239 = smul.u32 32, %s21
      %s240 = smul.u32 %s21, 256
      %s241 = scalar_lea.vmem %s219, %s240
      %v242 = vld [vmem:[%s241] sm:$0xff]
      %v243 = vld [vmem:[%s241 + $0x8] sm:$0xff]
      %v244 = vld [vmem:[%s241 + $0x10] sm:$0xff]
      %v245 = vld [vmem:[%s241 + $0x18] sm:$0xff]
      %v246 = vld [vmem:[%s241 + $0x20] sm:$0xff]
      %v247 = vld [vmem:[%s241 + $0x28] sm:$0xff]
      %v248 = vld [vmem:[%s241 + $0x30] sm:$0xff]
      %v249 = vld [vmem:[%s241 + $0x38] sm:$0xff]
      %v250 = vld [vmem:[%s241 + $0x40] sm:$0xff]
      %v251 = vld [vmem:[%s241 + $0x48] sm:$0xff]
      %v252 = vld [vmem:[%s241 + $0x50] sm:$0xff]
      %v253 = vld [vmem:[%s241 + $0x58] sm:$0xff]
      %v254 = vld [vmem:[%s241 + $0x60] sm:$0xff]
      %v255 = vld [vmem:[%s241 + $0x68] sm:$0xff]
      %v256 = vld [vmem:[%s241 + $0x70] sm:$0xff]
      %v257 = vld [vmem:[%s241 + $0x78] sm:$0xff]
      %v258 = vld [vmem:[%s241 + $0x80] sm:$0xff]
      %v259 = vld [vmem:[%s241 + $0x88] sm:$0xff]
      %v260 = vld [vmem:[%s241 + $0x90] sm:$0xff]
      %v261 = vld [vmem:[%s241 + $0x98] sm:$0xff]
      %v262 = vld [vmem:[%s241 + $0xa0] sm:$0xff]
      %v263 = vld [vmem:[%s241 + $0xa8] sm:$0xff]
      %v264 = vld [vmem:[%s241 + $0xb0] sm:$0xff]
      %v265 = vld [vmem:[%s241 + $0xb8] sm:$0xff]
      %v266 = vld [vmem:[%s241 + $0xc0] sm:$0xff]
      %v267 = vld [vmem:[%s241 + $0xc8] sm:$0xff]
      %v268 = vld [vmem:[%s241 + $0xd0] sm:$0xff]
      %v269 = vld [vmem:[%s241 + $0xd8] sm:$0xff]
      %v270 = vld [vmem:[%s241 + $0xe0] sm:$0xff]
      %v271 = vld [vmem:[%s241 + $0xe8] sm:$0xff]
      %v272 = vld [vmem:[%s241 + $0xf0] sm:$0xff]
      %v273 = vld [vmem:[%s241 + $0xf8] sm:$0xff]
      %v274 = vld [vmem:[%s241 + $0x100] sm:$0xff]
      %v275 = vld [vmem:[%s241 + $0x108] sm:$0xff]
      %v276 = vld [vmem:[%s241 + $0x110] sm:$0xff]
      %v277 = vld [vmem:[%s241 + $0x118] sm:$0xff]
      %v278 = vld [vmem:[%s241 + $0x120] sm:$0xff]
      %v279 = vld [vmem:[%s241 + $0x128] sm:$0xff]
      %v280 = vld [vmem:[%s241 + $0x130] sm:$0xff]
      %vm314 = vcmask 1046528
      %v315 = vrot.slane %v242, 1
      %v316 = vrot.slane %v243, 1
      %v317 = vsel %vm314, %v315, %v316
      %v318 = vrot.slane %v244, 1
      %v319 = vsel %vm314, %v316, %v318
      %v320 = vrot.slane %v245, 1
      %v321 = vsel %vm314, %v318, %v320
      %v322 = vrot.slane %v246, 1
      %v323 = vsel %vm314, %v320, %v322
      %v324 = vrot.slane %v247, 1
      %v325 = vsel %vm314, %v322, %v324
      %v326 = vrot.slane %v248, 1
      %v327 = vsel %vm314, %v324, %v326
      %v328 = vrot.slane %v249, 1
      %v329 = vsel %vm314, %v326, %v328
      %v330 = vrot.slane %v250, 1
      %v331 = vsel %vm314, %v328, %v330
      %v332 = vrot.slane %v251, 1
      %v333 = vsel %vm314, %v330, %v332
      %v334 = vrot.slane %v252, 1
      %v335 = vsel %vm314, %v332, %v334
      %v336 = vrot.slane %v253, 1
      %v337 = vsel %vm314, %v334, %v336
      %v338 = vrot.slane %v254, 1
      %v339 = vsel %vm314, %v336, %v338
      %v340 = vrot.slane %v255, 1
      %v341 = vsel %vm314, %v338, %v340
      %v342 = vrot.slane %v256, 1
      %v343 = vsel %vm314, %v340, %v342
      %v344 = vrot.slane %v257, 1
      %v345 = vsel %vm314, %v342, %v344
      %v346 = vrot.slane %v258, 1
      %v347 = vsel %vm314, %v344, %v346
      %v348 = vrot.slane %v259, 1
      %v349 = vsel %vm314, %v346, %v348
      %v350 = vrot.slane %v260, 1
      %v351 = vsel %vm314, %v348, %v350
      %v352 = vrot.slane %v261, 1
      %v353 = vsel %vm314, %v350, %v352
      %v354 = vrot.slane %v262, 1
      %v355 = vsel %vm314, %v352, %v354
      %v356 = vrot.slane %v263, 1
      %v357 = vsel %vm314, %v354, %v356
      %v358 = vrot.slane %v264, 1
      %v359 = vsel %vm314, %v356, %v358
      %v360 = vrot.slane %v265, 1
      %v361 = vsel %vm314, %v358, %v360
      %v362 = vrot.slane %v266, 1
      %v363 = vsel %vm314, %v360, %v362
      %v364 = vrot.slane %v267, 1
      %v365 = vsel %vm314, %v362, %v364
      %v366 = vrot.slane %v268, 1
      %v367 = vsel %vm314, %v364, %v366
      %v368 = vrot.slane %v269, 1
      %v369 = vsel %vm314, %v366, %v368
      %v370 = vrot.slane %v270, 1
      %v371 = vsel %vm314, %v368, %v370
      %v372 = vrot.slane %v271, 1
      %v373 = vsel %vm314, %v370, %v372
      %v374 = vrot.slane %v272, 1
      %v375 = vsel %vm314, %v372, %v374
      %v376 = vrot.slane %v273, 1
      %v377 = vsel %vm314, %v374, %v376
      %v378 = vrot.slane %v274, 1
      %v379 = vsel %vm314, %v376, %v378
      %380 = vrot.lane.b32.xlu0 %v317, 4
      %v381 = vpop.permute.xlu0 %380
      %382 = vrot.lane.b32.xlu0 %v319, 4
      %v383 = vpop.permute.xlu0 %382
      %384 = vrot.lane.b32.xlu0 %v321, 4
      %v385 = vpop.permute.xlu0 %384
      %386 = vrot.lane.b32.xlu0 %v323, 4
      %v387 = vpop.permute.xlu0 %386
      %388 = vrot.lane.b32.xlu0 %v325, 4
      %v389 = vpop.permute.xlu0 %388
      %390 = vrot.lane.b32.xlu0 %v327, 4
      %v391 = vpop.permute.xlu0 %390
      %392 = vrot.lane.b32.xlu0 %v329, 4
      %v393 = vpop.permute.xlu0 %392
      %394 = vrot.lane.b32.xlu0 %v331, 4
      %v395 = vpop.permute.xlu0 %394
      %396 = vrot.lane.b32.xlu0 %v333, 4
      %v397 = vpop.permute.xlu0 %396
      %398 = vrot.lane.b32.xlu0 %v335, 4
      %v399 = vpop.permute.xlu0 %398
      %400 = vrot.lane.b32.xlu0 %v337, 4
      %v401 = vpop.permute.xlu0 %400
      %402 = vrot.lane.b32.xlu0 %v339, 4
      %v403 = vpop.permute.xlu0 %402
      %404 = vrot.lane.b32.xlu0 %v341, 4
      %v405 = vpop.permute.xlu0 %404
      %406 = vrot.lane.b32.xlu0 %v343, 4
      %v407 = vpop.permute.xlu0 %406
      %408 = vrot.lane.b32.xlu0 %v345, 4
      %v409 = vpop.permute.xlu0 %408
      %410 = vrot.lane.b32.xlu0 %v347, 4
      %v411 = vpop.permute.xlu0 %410
      %412 = vrot.lane.b32.xlu0 %v349, 4
      %v413 = vpop.permute.xlu0 %412
      %414 = vrot.lane.b32.xlu0 %v351, 4
      %v415 = vpop.permute.xlu0 %414
      %416 = vrot.lane.b32.xlu0 %v353, 4
      %v417 = vpop.permute.xlu0 %416
      %418 = vrot.lane.b32.xlu0 %v355, 4
      %v419 = vpop.permute.xlu0 %418
      %420 = vrot.lane.b32.xlu0 %v357, 4
      %v421 = vpop.permute.xlu0 %420
      %422 = vrot.lane.b32.xlu0 %v359, 4
      %v423 = vpop.permute.xlu0 %422
      %424 = vrot.lane.b32.xlu0 %v361, 4
      %v425 = vpop.permute.xlu0 %424
      %426 = vrot.lane.b32.xlu0 %v363, 4
      %v427 = vpop.permute.xlu0 %426
      %428 = vrot.lane.b32.xlu0 %v365, 4
      %v429 = vpop.permute.xlu0 %428
      %430 = vrot.lane.b32.xlu0 %v367, 4
      %v431 = vpop.permute.xlu0 %430
      %432 = vrot.lane.b32.xlu0 %v369, 4
      %v433 = vpop.permute.xlu0 %432
      %434 = vrot.lane.b32.xlu0 %v371, 4
      %v435 = vpop.permute.xlu0 %434
      %436 = vrot.lane.b32.xlu0 %v373, 4
      %v437 = vpop.permute.xlu0 %436
      %438 = vrot.lane.b32.xlu0 %v375, 4
      %v439 = vpop.permute.xlu0 %438
      %440 = vrot.lane.b32.xlu0 %v377, 4
      %v441 = vpop.permute.xlu0 %440
      %442 = vrot.lane.b32.xlu0 %v379, 4
      %v443 = vpop.permute.xlu0 %442
      %vm476 = vcmask 1045504
      %v477 = vrot.slane %v242, 2
      %v478 = vrot.slane %v243, 2
      %v479 = vsel %vm476, %v477, %v478
      %v480 = vrot.slane %v244, 2
      %v481 = vsel %vm476, %v478, %v480
      %v482 = vrot.slane %v245, 2
      %v483 = vsel %vm476, %v480, %v482
      %v484 = vrot.slane %v246, 2
      %v485 = vsel %vm476, %v482, %v484
      %v486 = vrot.slane %v247, 2
      %v487 = vsel %vm476, %v484, %v486
      %v488 = vrot.slane %v248, 2
      %v489 = vsel %vm476, %v486, %v488
      %v490 = vrot.slane %v249, 2
      %v491 = vsel %vm476, %v488, %v490
      %v492 = vrot.slane %v250, 2
      %v493 = vsel %vm476, %v490, %v492
      %v494 = vrot.slane %v251, 2
      %v495 = vsel %vm476, %v492, %v494
      %v496 = vrot.slane %v252, 2
      %v497 = vsel %vm476, %v494, %v496
      %v498 = vrot.slane %v253, 2
      %v499 = vsel %vm476, %v496, %v498
      %v500 = vrot.slane %v254, 2
      %v501 = vsel %vm476, %v498, %v500
      %v502 = vrot.slane %v255, 2
      %v503 = vsel %vm476, %v500, %v502
      %v504 = vrot.slane %v256, 2
      %v505 = vsel %vm476, %v502, %v504
      %v506 = vrot.slane %v257, 2
      %v507 = vsel %vm476, %v504, %v506
      %v508 = vrot.slane %v258, 2
      %v509 = vsel %vm476, %v506, %v508
      %v510 = vrot.slane %v259, 2
      %v511 = vsel %vm476, %v508, %v510
      %v512 = vrot.slane %v260, 2
      %v513 = vsel %vm476, %v510, %v512
      %v514 = vrot.slane %v261, 2
      %v515 = vsel %vm476, %v512, %v514
      %v516 = vrot.slane %v262, 2
      %v517 = vsel %vm476, %v514, %v516
      %v518 = vrot.slane %v263, 2
      %v519 = vsel %vm476, %v516, %v518
      %v520 = vrot.slane %v264, 2
      %v521 = vsel %vm476, %v518, %v520
      %v522 = vrot.slane %v265, 2
      %v523 = vsel %vm476, %v520, %v522
      %v524 = vrot.slane %v266, 2
      %v525 = vsel %vm476, %v522, %v524
      %v526 = vrot.slane %v267, 2
      %v527 = vsel %vm476, %v524, %v526
      %v528 = vrot.slane %v268, 2
      %v529 = vsel %vm476, %v526, %v528
      %v530 = vrot.slane %v269, 2
      %v531 = vsel %vm476, %v528, %v530
      %v532 = vrot.slane %v270, 2
      %v533 = vsel %vm476, %v530, %v532
      %v534 = vrot.slane %v271, 2
      %v535 = vsel %vm476, %v532, %v534
      %v536 = vrot.slane %v272, 2
      %v537 = vsel %vm476, %v534, %v536
      %v538 = vrot.slane %v273, 2
      %v539 = vsel %vm476, %v536, %v538
      %v540 = vrot.slane %v274, 2
      %v541 = vsel %vm476, %v538, %v540
      %542 = vrot.lane.b32.xlu0 %v479, 8
      %v543 = vpop.permute.xlu0 %542
      %544 = vrot.lane.b32.xlu0 %v481, 8
      %v545 = vpop.permute.xlu0 %544
      %546 = vrot.lane.b32.xlu0 %v483, 8
      %v547 = vpop.permute.xlu0 %546
      %548 = vrot.lane.b32.xlu0 %v485, 8
      %v549 = vpop.permute.xlu0 %548
      %550 = vrot.lane.b32.xlu0 %v487, 8
      %v551 = vpop.permute.xlu0 %550
      %552 = vrot.lane.b32.xlu0 %v489, 8
      %v553 = vpop.permute.xlu0 %552
      %554 = vrot.lane.b32.xlu0 %v491, 8
      %v555 = vpop.permute.xlu0 %554
      %556 = vrot.lane.b32.xlu0 %v493, 8
      %v557 = vpop.permute.xlu0 %556
      %558 = vrot.lane.b32.xlu0 %v495, 8
      %v559 = vpop.permute.xlu0 %558
      %560 = vrot.lane.b32.xlu0 %v497, 8
      %v561 = vpop.permute.xlu0 %560
      %562 = vrot.lane.b32.xlu0 %v499, 8
      %v563 = vpop.permute.xlu0 %562
      %564 = vrot.lane.b32.xlu0 %v501, 8
      %v565 = vpop.permute.xlu0 %564
      %566 = vrot.lane.b32.xlu0 %v503, 8
      %v567 = vpop.permute.xlu0 %566
      %568 = vrot.lane.b32.xlu0 %v505, 8
      %v569 = vpop.permute.xlu0 %568
      %570 = vrot.lane.b32.xlu0 %v507, 8
      %v571 = vpop.permute.xlu0 %570
      %572 = vrot.lane.b32.xlu0 %v509, 8
      %v573 = vpop.permute.xlu0 %572
      %574 = vrot.lane.b32.xlu0 %v511, 8
      %v575 = vpop.permute.xlu0 %574
      %576 = vrot.lane.b32.xlu0 %v513, 8
      %v577 = vpop.permute.xlu0 %576
      %578 = vrot.lane.b32.xlu0 %v515, 8
      %v579 = vpop.permute.xlu0 %578
      %580 = vrot.lane.b32.xlu0 %v517, 8
      %v581 = vpop.permute.xlu0 %580
      %582 = vrot.lane.b32.xlu0 %v519, 8
      %v583 = vpop.permute.xlu0 %582
      %584 = vrot.lane.b32.xlu0 %v521, 8
      %v585 = vpop.permute.xlu0 %584
      %586 = vrot.lane.b32.xlu0 %v523, 8
      %v587 = vpop.permute.xlu0 %586
      %588 = vrot.lane.b32.xlu0 %v525, 8
      %v589 = vpop.permute.xlu0 %588
      %590 = vrot.lane.b32.xlu0 %v527, 8
      %v591 = vpop.permute.xlu0 %590
      %592 = vrot.lane.b32.xlu0 %v529, 8
      %v593 = vpop.permute.xlu0 %592
      %594 = vrot.lane.b32.xlu0 %v531, 8
      %v595 = vpop.permute.xlu0 %594
      %596 = vrot.lane.b32.xlu0 %v533, 8
      %v597 = vpop.permute.xlu0 %596
      %598 = vrot.lane.b32.xlu0 %v535, 8
      %v599 = vpop.permute.xlu0 %598
      %600 = vrot.lane.b32.xlu0 %v537, 8
      %v601 = vpop.permute.xlu0 %600
      %602 = vrot.lane.b32.xlu0 %v539, 8
      %v603 = vpop.permute.xlu0 %602
      %604 = vrot.lane.b32.xlu0 %v541, 8
      %v605 = vpop.permute.xlu0 %604
      %640 = vrot.lane.b32.xlu0 %v245, 12
      %v641 = vpop.permute.xlu0 %640
      %642 = vrot.lane.b32.xlu0 %v246, 12
      %v643 = vpop.permute.xlu0 %642
      %644 = vrot.lane.b32.xlu0 %v247, 12
      %v645 = vpop.permute.xlu0 %644
      %646 = vrot.lane.b32.xlu0 %v248, 12
      %v647 = vpop.permute.xlu0 %646
      %648 = vrot.lane.b32.xlu0 %v249, 12
      %v649 = vpop.permute.xlu0 %648
      %650 = vrot.lane.b32.xlu0 %v250, 12
      %v651 = vpop.permute.xlu0 %650
      %652 = vrot.lane.b32.xlu0 %v251, 12
      %v653 = vpop.permute.xlu0 %652
      %654 = vrot.lane.b32.xlu0 %v252, 12
      %v655 = vpop.permute.xlu0 %654
      %656 = vrot.lane.b32.xlu0 %v253, 12
      %v657 = vpop.permute.xlu0 %656
      %658 = vrot.lane.b32.xlu0 %v254, 12
      %v659 = vpop.permute.xlu0 %658
      %660 = vrot.lane.b32.xlu0 %v255, 12
      %v661 = vpop.permute.xlu0 %660
      %662 = vrot.lane.b32.xlu0 %v256, 12
      %v663 = vpop.permute.xlu0 %662
      %664 = vrot.lane.b32.xlu0 %v257, 12
      %v665 = vpop.permute.xlu0 %664
      %666 = vrot.lane.b32.xlu0 %v258, 12
      %v667 = vpop.permute.xlu0 %666
      %668 = vrot.lane.b32.xlu0 %v259, 12
      %v669 = vpop.permute.xlu0 %668
      %670 = vrot.lane.b32.xlu0 %v260, 12
      %v671 = vpop.permute.xlu0 %670
      %672 = vrot.lane.b32.xlu0 %v261, 12
      %v673 = vpop.permute.xlu0 %672
      %674 = vrot.lane.b32.xlu0 %v262, 12
      %v675 = vpop.permute.xlu0 %674
      %676 = vrot.lane.b32.xlu0 %v263, 12
      %v677 = vpop.permute.xlu0 %676
      %678 = vrot.lane.b32.xlu0 %v264, 12
      %v679 = vpop.permute.xlu0 %678
      %680 = vrot.lane.b32.xlu0 %v265, 12
      %v681 = vpop.permute.xlu0 %680
      %682 = vrot.lane.b32.xlu0 %v266, 12
      %v683 = vpop.permute.xlu0 %682
      %684 = vrot.lane.b32.xlu0 %v267, 12
      %v685 = vpop.permute.xlu0 %684
      %686 = vrot.lane.b32.xlu0 %v268, 12
      %v687 = vpop.permute.xlu0 %686
      %688 = vrot.lane.b32.xlu0 %v269, 12
      %v689 = vpop.permute.xlu0 %688
      %690 = vrot.lane.b32.xlu0 %v270, 12
      %v691 = vpop.permute.xlu0 %690
      %692 = vrot.lane.b32.xlu0 %v271, 12
      %v693 = vpop.permute.xlu0 %692
      %694 = vrot.lane.b32.xlu0 %v272, 12
      %v695 = vpop.permute.xlu0 %694
      %696 = vrot.lane.b32.xlu0 %v273, 12
      %v697 = vpop.permute.xlu0 %696
      %698 = vrot.lane.b32.xlu0 %v274, 12
      %v699 = vpop.permute.xlu0 %698
      %700 = vrot.lane.b32.xlu0 %v275, 12
      %v701 = vpop.permute.xlu0 %700
      %702 = vrot.lane.b32.xlu0 %v276, 12
      %v703 = vpop.permute.xlu0 %702
      %v737 = vrot.slane %v275, 1
      %v738 = vsel %vm314, %v378, %v737
      %v739 = vrot.slane %v276, 1
      %v740 = vsel %vm314, %v737, %v739
      %v741 = vrot.slane %v277, 1
      %v742 = vsel %vm314, %v739, %v741
      %743 = vrot.lane.b32.xlu0 %v323, 16
      %v744 = vpop.permute.xlu0 %743
      %745 = vrot.lane.b32.xlu0 %v325, 16
      %v746 = vpop.permute.xlu0 %745
      %747 = vrot.lane.b32.xlu0 %v327, 16
      %v748 = vpop.permute.xlu0 %747
      %749 = vrot.lane.b32.xlu0 %v329, 16
      %v750 = vpop.permute.xlu0 %749
      %751 = vrot.lane.b32.xlu0 %v331, 16
      %v752 = vpop.permute.xlu0 %751
      %753 = vrot.lane.b32.xlu0 %v333, 16
      %v754 = vpop.permute.xlu0 %753
      %755 = vrot.lane.b32.xlu0 %v335, 16
      %v756 = vpop.permute.xlu0 %755
      %757 = vrot.lane.b32.xlu0 %v337, 16
      %v758 = vpop.permute.xlu0 %757
      %759 = vrot.lane.b32.xlu0 %v339, 16
      %v760 = vpop.permute.xlu0 %759
      %761 = vrot.lane.b32.xlu0 %v341, 16
      %v762 = vpop.permute.xlu0 %761
      %763 = vrot.lane.b32.xlu0 %v343, 16
      %v764 = vpop.permute.xlu0 %763
      %765 = vrot.lane.b32.xlu0 %v345, 16
      %v766 = vpop.permute.xlu0 %765
      %767 = vrot.lane.b32.xlu0 %v347, 16
      %v768 = vpop.permute.xlu0 %767
      %769 = vrot.lane.b32.xlu0 %v349, 16
      %v770 = vpop.permute.xlu0 %769
      %771 = vrot.lane.b32.xlu0 %v351, 16
      %v772 = vpop.permute.xlu0 %771
      %773 = vrot.lane.b32.xlu0 %v353, 16
      %v774 = vpop.permute.xlu0 %773
      %775 = vrot.lane.b32.xlu0 %v355, 16
      %v776 = vpop.permute.xlu0 %775
      %777 = vrot.lane.b32.xlu0 %v357, 16
      %v778 = vpop.permute.xlu0 %777
      %779 = vrot.lane.b32.xlu0 %v359, 16
      %v780 = vpop.permute.xlu0 %779
      %781 = vrot.lane.b32.xlu0 %v361, 16
      %v782 = vpop.permute.xlu0 %781
      %783 = vrot.lane.b32.xlu0 %v363, 16
      %v784 = vpop.permute.xlu0 %783
      %785 = vrot.lane.b32.xlu0 %v365, 16
      %v786 = vpop.permute.xlu0 %785
      %787 = vrot.lane.b32.xlu0 %v367, 16
      %v788 = vpop.permute.xlu0 %787
      %789 = vrot.lane.b32.xlu0 %v369, 16
      %v790 = vpop.permute.xlu0 %789
      %791 = vrot.lane.b32.xlu0 %v371, 16
      %v792 = vpop.permute.xlu0 %791
      %793 = vrot.lane.b32.xlu0 %v373, 16
      %v794 = vpop.permute.xlu0 %793
      %795 = vrot.lane.b32.xlu0 %v375, 16
      %v796 = vpop.permute.xlu0 %795
      %797 = vrot.lane.b32.xlu0 %v377, 16
      %v798 = vpop.permute.xlu0 %797
      %799 = vrot.lane.b32.xlu0 %v379, 16
      %v800 = vpop.permute.xlu0 %799
      %801 = vrot.lane.b32.xlu0 %v738, 16
      %v802 = vpop.permute.xlu0 %801
      %803 = vrot.lane.b32.xlu0 %v740, 16
      %v804 = vpop.permute.xlu0 %803
      %805 = vrot.lane.b32.xlu0 %v742, 16
      %v806 = vpop.permute.xlu0 %805
      %v839 = vrot.slane %v275, 2
      %v840 = vsel %vm476, %v540, %v839
      %v841 = vrot.slane %v276, 2
      %v842 = vsel %vm476, %v839, %v841
      %v843 = vrot.slane %v277, 2
      %v844 = vsel %vm476, %v841, %v843
      %845 = vrot.lane.b32.xlu0 %v485, 20
      %v846 = vpop.permute.xlu0 %845
      %847 = vrot.lane.b32.xlu0 %v487, 20
      %v848 = vpop.permute.xlu0 %847
      %849 = vrot.lane.b32.xlu0 %v489, 20
      %v850 = vpop.permute.xlu0 %849
      %851 = vrot.lane.b32.xlu0 %v491, 20
      %v852 = vpop.permute.xlu0 %851
      %853 = vrot.lane.b32.xlu0 %v493, 20
      %v854 = vpop.permute.xlu0 %853
      %855 = vrot.lane.b32.xlu0 %v495, 20
      %v856 = vpop.permute.xlu0 %855
      %857 = vrot.lane.b32.xlu0 %v497, 20
      %v858 = vpop.permute.xlu0 %857
      %859 = vrot.lane.b32.xlu0 %v499, 20
      %v860 = vpop.permute.xlu0 %859
      %861 = vrot.lane.b32.xlu0 %v501, 20
      %v862 = vpop.permute.xlu0 %861
      %863 = vrot.lane.b32.xlu0 %v503, 20
      %v864 = vpop.permute.xlu0 %863
      %865 = vrot.lane.b32.xlu0 %v505, 20
      %v866 = vpop.permute.xlu0 %865
      %867 = vrot.lane.b32.xlu0 %v507, 20
      %v868 = vpop.permute.xlu0 %867
      %869 = vrot.lane.b32.xlu0 %v509, 20
      %v870 = vpop.permute.xlu0 %869
      %871 = vrot.lane.b32.xlu0 %v511, 20
      %v872 = vpop.permute.xlu0 %871
      %873 = vrot.lane.b32.xlu0 %v513, 20
      %v874 = vpop.permute.xlu0 %873
      %875 = vrot.lane.b32.xlu0 %v515, 20
      %v876 = vpop.permute.xlu0 %875
      %877 = vrot.lane.b32.xlu0 %v517, 20
      %v878 = vpop.permute.xlu0 %877
      %879 = vrot.lane.b32.xlu0 %v519, 20
      %v880 = vpop.permute.xlu0 %879
      %881 = vrot.lane.b32.xlu0 %v521, 20
      %v882 = vpop.permute.xlu0 %881
      %883 = vrot.lane.b32.xlu0 %v523, 20
      %v884 = vpop.permute.xlu0 %883
      %885 = vrot.lane.b32.xlu0 %v525, 20
      %v886 = vpop.permute.xlu0 %885
      %887 = vrot.lane.b32.xlu0 %v527, 20
      %v888 = vpop.permute.xlu0 %887
      %889 = vrot.lane.b32.xlu0 %v529, 20
      %v890 = vpop.permute.xlu0 %889
      %891 = vrot.lane.b32.xlu0 %v531, 20
      %v892 = vpop.permute.xlu0 %891
      %893 = vrot.lane.b32.xlu0 %v533, 20
      %v894 = vpop.permute.xlu0 %893
      %895 = vrot.lane.b32.xlu0 %v535, 20
      %v896 = vpop.permute.xlu0 %895
      %897 = vrot.lane.b32.xlu0 %v537, 20
      %v898 = vpop.permute.xlu0 %897
      %899 = vrot.lane.b32.xlu0 %v539, 20
      %v900 = vpop.permute.xlu0 %899
      %901 = vrot.lane.b32.xlu0 %v541, 20
      %v902 = vpop.permute.xlu0 %901
      %903 = vrot.lane.b32.xlu0 %v840, 20
      %v904 = vpop.permute.xlu0 %903
      %905 = vrot.lane.b32.xlu0 %v842, 20
      %v906 = vpop.permute.xlu0 %905
      %907 = vrot.lane.b32.xlu0 %v844, 20
      %v908 = vpop.permute.xlu0 %907
      %943 = vrot.lane.b32.xlu0 %v248, 24
      %v944 = vpop.permute.xlu0 %943
      %945 = vrot.lane.b32.xlu0 %v249, 24
      %v946 = vpop.permute.xlu0 %945
      %947 = vrot.lane.b32.xlu0 %v250, 24
      %v948 = vpop.permute.xlu0 %947
      %949 = vrot.lane.b32.xlu0 %v251, 24
      %v950 = vpop.permute.xlu0 %949
      %951 = vrot.lane.b32.xlu0 %v252, 24
      %v952 = vpop.permute.xlu0 %951
      %953 = vrot.lane.b32.xlu0 %v253, 24
      %v954 = vpop.permute.xlu0 %953
      %955 = vrot.lane.b32.xlu0 %v254, 24
      %v956 = vpop.permute.xlu0 %955
      %957 = vrot.lane.b32.xlu0 %v255, 24
      %v958 = vpop.permute.xlu0 %957
      %959 = vrot.lane.b32.xlu0 %v256, 24
      %v960 = vpop.permute.xlu0 %959
      %961 = vrot.lane.b32.xlu0 %v257, 24
      %v962 = vpop.permute.xlu0 %961
      %963 = vrot.lane.b32.xlu0 %v258, 24
      %v964 = vpop.permute.xlu0 %963
      %965 = vrot.lane.b32.xlu0 %v259, 24
      %v966 = vpop.permute.xlu0 %965
      %967 = vrot.lane.b32.xlu0 %v260, 24
      %v968 = vpop.permute.xlu0 %967
      %969 = vrot.lane.b32.xlu0 %v261, 24
      %v970 = vpop.permute.xlu0 %969
      %971 = vrot.lane.b32.xlu0 %v262, 24
      %v972 = vpop.permute.xlu0 %971
      %973 = vrot.lane.b32.xlu0 %v263, 24
      %v974 = vpop.permute.xlu0 %973
      %975 = vrot.lane.b32.xlu0 %v264, 24
      %v976 = vpop.permute.xlu0 %975
      %977 = vrot.lane.b32.xlu0 %v265, 24
      %v978 = vpop.permute.xlu0 %977
      %979 = vrot.lane.b32.xlu0 %v266, 24
      %v980 = vpop.permute.xlu0 %979
      %981 = vrot.lane.b32.xlu0 %v267, 24
      %v982 = vpop.permute.xlu0 %981
      %983 = vrot.lane.b32.xlu0 %v268, 24
      %v984 = vpop.permute.xlu0 %983
      %985 = vrot.lane.b32.xlu0 %v269, 24
      %v986 = vpop.permute.xlu0 %985
      %987 = vrot.lane.b32.xlu0 %v270, 24
      %v988 = vpop.permute.xlu0 %987
      %989 = vrot.lane.b32.xlu0 %v271, 24
      %v990 = vpop.permute.xlu0 %989
      %991 = vrot.lane.b32.xlu0 %v272, 24
      %v992 = vpop.permute.xlu0 %991
      %993 = vrot.lane.b32.xlu0 %v273, 24
      %v994 = vpop.permute.xlu0 %993
      %995 = vrot.lane.b32.xlu0 %v274, 24
      %v996 = vpop.permute.xlu0 %995
      %997 = vrot.lane.b32.xlu0 %v275, 24
      %v998 = vpop.permute.xlu0 %997
      %999 = vrot.lane.b32.xlu0 %v276, 24
      %v1000 = vpop.permute.xlu0 %999
      %1001 = vrot.lane.b32.xlu0 %v277, 24
      %v1002 = vpop.permute.xlu0 %1001
      %1003 = vrot.lane.b32.xlu0 %v278, 24
      %v1004 = vpop.permute.xlu0 %1003
      %1005 = vrot.lane.b32.xlu0 %v279, 24
      %v1006 = vpop.permute.xlu0 %1005
      %v1040 = vrot.slane %v278, 1
      %v1041 = vsel %vm314, %v741, %v1040
      %v1042 = vrot.slane %v279, 1
      %v1043 = vsel %vm314, %v1040, %v1042
      %v1044 = vrot.slane %v280, 1
      %v1045 = vsel %vm314, %v1042, %v1044
      %1046 = vrot.lane.b32.xlu0 %v329, 28
      %v1047 = vpop.permute.xlu0 %1046
      %1048 = vrot.lane.b32.xlu0 %v331, 28
      %v1049 = vpop.permute.xlu0 %1048
      %1050 = vrot.lane.b32.xlu0 %v333, 28
      %v1051 = vpop.permute.xlu0 %1050
      %1052 = vrot.lane.b32.xlu0 %v335, 28
      %v1053 = vpop.permute.xlu0 %1052
      %1054 = vrot.lane.b32.xlu0 %v337, 28
      %v1055 = vpop.permute.xlu0 %1054
      %1056 = vrot.lane.b32.xlu0 %v339, 28
      %v1057 = vpop.permute.xlu0 %1056
      %1058 = vrot.lane.b32.xlu0 %v341, 28
      %v1059 = vpop.permute.xlu0 %1058
      %1060 = vrot.lane.b32.xlu0 %v343, 28
      %v1061 = vpop.permute.xlu0 %1060
      %1062 = vrot.lane.b32.xlu0 %v345, 28
      %v1063 = vpop.permute.xlu0 %1062
      %1064 = vrot.lane.b32.xlu0 %v347, 28
      %v1065 = vpop.permute.xlu0 %1064
      %1066 = vrot.lane.b32.xlu0 %v349, 28
      %v1067 = vpop.permute.xlu0 %1066
      %1068 = vrot.lane.b32.xlu0 %v351, 28
      %v1069 = vpop.permute.xlu0 %1068
      %1070 = vrot.lane.b32.xlu0 %v353, 28
      %v1071 = vpop.permute.xlu0 %1070
      %1072 = vrot.lane.b32.xlu0 %v355, 28
      %v1073 = vpop.permute.xlu0 %1072
      %1074 = vrot.lane.b32.xlu0 %v357, 28
      %v1075 = vpop.permute.xlu0 %1074
      %1076 = vrot.lane.b32.xlu0 %v359, 28
      %v1077 = vpop.permute.xlu0 %1076
      %1078 = vrot.lane.b32.xlu0 %v361, 28
      %v1079 = vpop.permute.xlu0 %1078
      %1080 = vrot.lane.b32.xlu0 %v363, 28
      %v1081 = vpop.permute.xlu0 %1080
      %1082 = vrot.lane.b32.xlu0 %v365, 28
      %v1083 = vpop.permute.xlu0 %1082
      %1084 = vrot.lane.b32.xlu0 %v367, 28
      %v1085 = vpop.permute.xlu0 %1084
      %1086 = vrot.lane.b32.xlu0 %v369, 28
      %v1087 = vpop.permute.xlu0 %1086
      %1088 = vrot.lane.b32.xlu0 %v371, 28
      %v1089 = vpop.permute.xlu0 %1088
      %1090 = vrot.lane.b32.xlu0 %v373, 28
      %v1091 = vpop.permute.xlu0 %1090
      %1092 = vrot.lane.b32.xlu0 %v375, 28
      %v1093 = vpop.permute.xlu0 %1092
      %1094 = vrot.lane.b32.xlu0 %v377, 28
      %v1095 = vpop.permute.xlu0 %1094
      %1096 = vrot.lane.b32.xlu0 %v379, 28
      %v1097 = vpop.permute.xlu0 %1096
      %1098 = vrot.lane.b32.xlu0 %v738, 28
      %v1099 = vpop.permute.xlu0 %1098
      %1100 = vrot.lane.b32.xlu0 %v740, 28
      %v1101 = vpop.permute.xlu0 %1100
      %1102 = vrot.lane.b32.xlu0 %v742, 28
      %v1103 = vpop.permute.xlu0 %1102
      %1104 = vrot.lane.b32.xlu0 %v1041, 28
      %v1105 = vpop.permute.xlu0 %1104
      %1106 = vrot.lane.b32.xlu0 %v1043, 28
      %v1107 = vpop.permute.xlu0 %1106
      %1108 = vrot.lane.b32.xlu0 %v1045, 28
      %v1109 = vpop.permute.xlu0 %1108
      %v1142 = vrot.slane %v278, 2
      %v1143 = vsel %vm476, %v843, %v1142
      %v1144 = vrot.slane %v279, 2
      %v1145 = vsel %vm476, %v1142, %v1144
      %v1146 = vrot.slane %v280, 2
      %v1147 = vsel %vm476, %v1144, %v1146
      %1148 = vrot.lane.b32.xlu0 %v491, 32
      %v1149 = vpop.permute.xlu0 %1148
      %1150 = vrot.lane.b32.xlu0 %v493, 32
      %v1151 = vpop.permute.xlu0 %1150
      %1152 = vrot.lane.b32.xlu0 %v495, 32
      %v1153 = vpop.permute.xlu0 %1152
      %1154 = vrot.lane.b32.xlu0 %v497, 32
      %v1155 = vpop.permute.xlu0 %1154
      %1156 = vrot.lane.b32.xlu0 %v499, 32
      %v1157 = vpop.permute.xlu0 %1156
      %1158 = vrot.lane.b32.xlu0 %v501, 32
      %v1159 = vpop.permute.xlu0 %1158
      %1160 = vrot.lane.b32.xlu0 %v503, 32
      %v1161 = vpop.permute.xlu0 %1160
      %1162 = vrot.lane.b32.xlu0 %v505, 32
      %v1163 = vpop.permute.xlu0 %1162
      %1164 = vrot.lane.b32.xlu0 %v507, 32
      %v1165 = vpop.permute.xlu0 %1164
      %1166 = vrot.lane.b32.xlu0 %v509, 32
      %v1167 = vpop.permute.xlu0 %1166
      %1168 = vrot.lane.b32.xlu0 %v511, 32
      %v1169 = vpop.permute.xlu0 %1168
      %1170 = vrot.lane.b32.xlu0 %v513, 32
      %v1171 = vpop.permute.xlu0 %1170
      %1172 = vrot.lane.b32.xlu0 %v515, 32
      %v1173 = vpop.permute.xlu0 %1172
      %1174 = vrot.lane.b32.xlu0 %v517, 32
      %v1175 = vpop.permute.xlu0 %1174
      %1176 = vrot.lane.b32.xlu0 %v519, 32
      %v1177 = vpop.permute.xlu0 %1176
      %1178 = vrot.lane.b32.xlu0 %v521, 32
      %v1179 = vpop.permute.xlu0 %1178
      %1180 = vrot.lane.b32.xlu0 %v523, 32
      %v1181 = vpop.permute.xlu0 %1180
      %1182 = vrot.lane.b32.xlu0 %v525, 32
      %v1183 = vpop.permute.xlu0 %1182
      %1184 = vrot.lane.b32.xlu0 %v527, 32
      %v1185 = vpop.permute.xlu0 %1184
      %1186 = vrot.lane.b32.xlu0 %v529, 32
      %v1187 = vpop.permute.xlu0 %1186
      %1188 = vrot.lane.b32.xlu0 %v531, 32
      %v1189 = vpop.permute.xlu0 %1188
      %1190 = vrot.lane.b32.xlu0 %v533, 32
      %v1191 = vpop.permute.xlu0 %1190
      %1192 = vrot.lane.b32.xlu0 %v535, 32
      %v1193 = vpop.permute.xlu0 %1192
      %1194 = vrot.lane.b32.xlu0 %v537, 32
      %v1195 = vpop.permute.xlu0 %1194
      %1196 = vrot.lane.b32.xlu0 %v539, 32
      %v1197 = vpop.permute.xlu0 %1196
      %1198 = vrot.lane.b32.xlu0 %v541, 32
      %v1199 = vpop.permute.xlu0 %1198
      %1200 = vrot.lane.b32.xlu0 %v840, 32
      %v1201 = vpop.permute.xlu0 %1200
      %1202 = vrot.lane.b32.xlu0 %v842, 32
      %v1203 = vpop.permute.xlu0 %1202
      %1204 = vrot.lane.b32.xlu0 %v844, 32
      %v1205 = vpop.permute.xlu0 %1204
      %1206 = vrot.lane.b32.xlu0 %v1143, 32
      %v1207 = vpop.permute.xlu0 %1206
      %1208 = vrot.lane.b32.xlu0 %v1145, 32
      %v1209 = vpop.permute.xlu0 %1208
      %1210 = vrot.lane.b32.xlu0 %v1147, 32
      %v1211 = vpop.permute.xlu0 %1210
      %vm1244 = vcmask 31744
      %v1245 = vsel %vm1244, %v242, %v381
      %v1246 = vsel %vm1244, %v243, %v383
      %v1247 = vsel %vm1244, %v244, %v385
      %v1248 = vsel %vm1244, %v245, %v387
      %v1249 = vsel %vm1244, %v246, %v389
      %v1250 = vsel %vm1244, %v247, %v391
      %v1251 = vsel %vm1244, %v248, %v393
      %v1252 = vsel %vm1244, %v249, %v395
      %v1253 = vsel %vm1244, %v250, %v397
      %v1254 = vsel %vm1244, %v251, %v399
      %v1255 = vsel %vm1244, %v252, %v401
      %v1256 = vsel %vm1244, %v253, %v403
      %v1257 = vsel %vm1244, %v254, %v405
      %v1258 = vsel %vm1244, %v255, %v407
      %v1259 = vsel %vm1244, %v256, %v409
      %v1260 = vsel %vm1244, %v257, %v411
      %v1261 = vsel %vm1244, %v258, %v413
      %v1262 = vsel %vm1244, %v259, %v415
      %v1263 = vsel %vm1244, %v260, %v417
      %v1264 = vsel %vm1244, %v261, %v419
      %v1265 = vsel %vm1244, %v262, %v421
      %v1266 = vsel %vm1244, %v263, %v423
      %v1267 = vsel %vm1244, %v264, %v425
      %v1268 = vsel %vm1244, %v265, %v427
      %v1269 = vsel %vm1244, %v266, %v429
      %v1270 = vsel %vm1244, %v267, %v431
      %v1271 = vsel %vm1244, %v268, %v433
      %v1272 = vsel %vm1244, %v269, %v435
      %v1273 = vsel %vm1244, %v270, %v437
      %v1274 = vsel %vm1244, %v271, %v439
      %v1275 = vsel %vm1244, %v272, %v441
      %v1276 = vsel %vm1244, %v273, %v443
      %vm1277 = vcmask 64512
      %v1278 = vsel %vm1277, %v1245, %v543
      %v1279 = vsel %vm1277, %v1246, %v545
      %v1280 = vsel %vm1277, %v1247, %v547
      %v1281 = vsel %vm1277, %v1248, %v549
      %v1282 = vsel %vm1277, %v1249, %v551
      %v1283 = vsel %vm1277, %v1250, %v553
      %v1284 = vsel %vm1277, %v1251, %v555
      %v1285 = vsel %vm1277, %v1252, %v557
      %v1286 = vsel %vm1277, %v1253, %v559
      %v1287 = vsel %vm1277, %v1254, %v561
      %v1288 = vsel %vm1277, %v1255, %v563
      %v1289 = vsel %vm1277, %v1256, %v565
      %v1290 = vsel %vm1277, %v1257, %v567
      %v1291 = vsel %vm1277, %v1258, %v569
      %v1292 = vsel %vm1277, %v1259, %v571
      %v1293 = vsel %vm1277, %v1260, %v573
      %v1294 = vsel %vm1277, %v1261, %v575
      %v1295 = vsel %vm1277, %v1262, %v577
      %v1296 = vsel %vm1277, %v1263, %v579
      %v1297 = vsel %vm1277, %v1264, %v581
      %v1298 = vsel %vm1277, %v1265, %v583
      %v1299 = vsel %vm1277, %v1266, %v585
      %v1300 = vsel %vm1277, %v1267, %v587
      %v1301 = vsel %vm1277, %v1268, %v589
      %v1302 = vsel %vm1277, %v1269, %v591
      %v1303 = vsel %vm1277, %v1270, %v593
      %v1304 = vsel %vm1277, %v1271, %v595
      %v1305 = vsel %vm1277, %v1272, %v597
      %v1306 = vsel %vm1277, %v1273, %v599
      %v1307 = vsel %vm1277, %v1274, %v601
      %v1308 = vsel %vm1277, %v1275, %v603
      %v1309 = vsel %vm1277, %v1276, %v605
      %vm1310 = vcmask 97280
      %v1311 = vsel %vm1310, %v1278, %v641
      %v1312 = vsel %vm1310, %v1279, %v643
      %v1313 = vsel %vm1310, %v1280, %v645
      %v1314 = vsel %vm1310, %v1281, %v647
      %v1315 = vsel %vm1310, %v1282, %v649
      %v1316 = vsel %vm1310, %v1283, %v651
      %v1317 = vsel %vm1310, %v1284, %v653
      %v1318 = vsel %vm1310, %v1285, %v655
      %v1319 = vsel %vm1310, %v1286, %v657
      %v1320 = vsel %vm1310, %v1287, %v659
      %v1321 = vsel %vm1310, %v1288, %v661
      %v1322 = vsel %vm1310, %v1289, %v663
      %v1323 = vsel %vm1310, %v1290, %v665
      %v1324 = vsel %vm1310, %v1291, %v667
      %v1325 = vsel %vm1310, %v1292, %v669
      %v1326 = vsel %vm1310, %v1293, %v671
      %v1327 = vsel %vm1310, %v1294, %v673
      %v1328 = vsel %vm1310, %v1295, %v675
      %v1329 = vsel %vm1310, %v1296, %v677
      %v1330 = vsel %vm1310, %v1297, %v679
      %v1331 = vsel %vm1310, %v1298, %v681
      %v1332 = vsel %vm1310, %v1299, %v683
      %v1333 = vsel %vm1310, %v1300, %v685
      %v1334 = vsel %vm1310, %v1301, %v687
      %v1335 = vsel %vm1310, %v1302, %v689
      %v1336 = vsel %vm1310, %v1303, %v691
      %v1337 = vsel %vm1310, %v1304, %v693
      %v1338 = vsel %vm1310, %v1305, %v695
      %v1339 = vsel %vm1310, %v1306, %v697
      %v1340 = vsel %vm1310, %v1307, %v699
      %v1341 = vsel %vm1310, %v1308, %v701
      %v1342 = vsel %vm1310, %v1309, %v703
      %vm1343 = vcmask 130048
      %v1344 = vsel %vm1343, %v1311, %v744
      %v1345 = vsel %vm1343, %v1312, %v746
      %v1346 = vsel %vm1343, %v1313, %v748
      %v1347 = vsel %vm1343, %v1314, %v750
      %v1348 = vsel %vm1343, %v1315, %v752
      %v1349 = vsel %vm1343, %v1316, %v754
      %v1350 = vsel %vm1343, %v1317, %v756
      %v1351 = vsel %vm1343, %v1318, %v758
      %v1352 = vsel %vm1343, %v1319, %v760
      %v1353 = vsel %vm1343, %v1320, %v762
      %v1354 = vsel %vm1343, %v1321, %v764
      %v1355 = vsel %vm1343, %v1322, %v766
      %v1356 = vsel %vm1343, %v1323, %v768
      %v1357 = vsel %vm1343, %v1324, %v770
      %v1358 = vsel %vm1343, %v1325, %v772
      %v1359 = vsel %vm1343, %v1326, %v774
      %v1360 = vsel %vm1343, %v1327, %v776
      %v1361 = vsel %vm1343, %v1328, %v778
      %v1362 = vsel %vm1343, %v1329, %v780
      %v1363 = vsel %vm1343, %v1330, %v782
      %v1364 = vsel %vm1343, %v1331, %v784
      %v1365 = vsel %vm1343, %v1332, %v786
      %v1366 = vsel %vm1343, %v1333, %v788
      %v1367 = vsel %vm1343, %v1334, %v790
      %v1368 = vsel %vm1343, %v1335, %v792
      %v1369 = vsel %vm1343, %v1336, %v794
      %v1370 = vsel %vm1343, %v1337, %v796
      %v1371 = vsel %vm1343, %v1338, %v798
      %v1372 = vsel %vm1343, %v1339, %v800
      %v1373 = vsel %vm1343, %v1340, %v802
      %v1374 = vsel %vm1343, %v1341, %v804
      %v1375 = vsel %vm1343, %v1342, %v806
      %vm1376 = vcmask 162816
      %v1377 = vsel %vm1376, %v1344, %v846
      %v1378 = vsel %vm1376, %v1345, %v848
      %v1379 = vsel %vm1376, %v1346, %v850
      %v1380 = vsel %vm1376, %v1347, %v852
      %v1381 = vsel %vm1376, %v1348, %v854
      %v1382 = vsel %vm1376, %v1349, %v856
      %v1383 = vsel %vm1376, %v1350, %v858
      %v1384 = vsel %vm1376, %v1351, %v860
      %v1385 = vsel %vm1376, %v1352, %v862
      %v1386 = vsel %vm1376, %v1353, %v864
      %v1387 = vsel %vm1376, %v1354, %v866
      %v1388 = vsel %vm1376, %v1355, %v868
      %v1389 = vsel %vm1376, %v1356, %v870
      %v1390 = vsel %vm1376, %v1357, %v872
      %v1391 = vsel %vm1376, %v1358, %v874
      %v1392 = vsel %vm1376, %v1359, %v876
      %v1393 = vsel %vm1376, %v1360, %v878
      %v1394 = vsel %vm1376, %v1361, %v880
      %v1395 = vsel %vm1376, %v1362, %v882
      %v1396 = vsel %vm1376, %v1363, %v884
      %v1397 = vsel %vm1376, %v1364, %v886
      %v1398 = vsel %vm1376, %v1365, %v888
      %v1399 = vsel %vm1376, %v1366, %v890
      %v1400 = vsel %vm1376, %v1367, %v892
      %v1401 = vsel %vm1376, %v1368, %v894
      %v1402 = vsel %vm1376, %v1369, %v896
      %v1403 = vsel %vm1376, %v1370, %v898
      %v1404 = vsel %vm1376, %v1371, %v900
      %v1405 = vsel %vm1376, %v1372, %v902
      %v1406 = vsel %vm1376, %v1373, %v904
      %v1407 = vsel %vm1376, %v1374, %v906
      %v1408 = vsel %vm1376, %v1375, %v908
      %vm1409 = vcmask 195584
      %v1410 = vsel %vm1409, %v1377, %v944
      %v1411 = vsel %vm1409, %v1378, %v946
      %v1412 = vsel %vm1409, %v1379, %v948
      %v1413 = vsel %vm1409, %v1380, %v950
      %v1414 = vsel %vm1409, %v1381, %v952
      %v1415 = vsel %vm1409, %v1382, %v954
      %v1416 = vsel %vm1409, %v1383, %v956
      %v1417 = vsel %vm1409, %v1384, %v958
      %v1418 = vsel %vm1409, %v1385, %v960
      %v1419 = vsel %vm1409, %v1386, %v962
      %v1420 = vsel %vm1409, %v1387, %v964
      %v1421 = vsel %vm1409, %v1388, %v966
      %v1422 = vsel %vm1409, %v1389, %v968
      %v1423 = vsel %vm1409, %v1390, %v970
      %v1424 = vsel %vm1409, %v1391, %v972
      %v1425 = vsel %vm1409, %v1392, %v974
      %v1426 = vsel %vm1409, %v1393, %v976
      %v1427 = vsel %vm1409, %v1394, %v978
      %v1428 = vsel %vm1409, %v1395, %v980
      %v1429 = vsel %vm1409, %v1396, %v982
      %v1430 = vsel %vm1409, %v1397, %v984
      %v1431 = vsel %vm1409, %v1398, %v986
      %v1432 = vsel %vm1409, %v1399, %v988
      %v1433 = vsel %vm1409, %v1400, %v990
      %v1434 = vsel %vm1409, %v1401, %v992
      %v1435 = vsel %vm1409, %v1402, %v994
      %v1436 = vsel %vm1409, %v1403, %v996
      %v1437 = vsel %vm1409, %v1404, %v998
      %v1438 = vsel %vm1409, %v1405, %v1000
      %v1439 = vsel %vm1409, %v1406, %v1002
      %v1440 = vsel %vm1409, %v1407, %v1004
      %v1441 = vsel %vm1409, %v1408, %v1006
      %vm1442 = vcmask 228352
      %v1443 = vsel %vm1442, %v1410, %v1047
      %v1444 = vsel %vm1442, %v1411, %v1049
      %v1445 = vsel %vm1442, %v1412, %v1051
      %v1446 = vsel %vm1442, %v1413, %v1053
      %v1447 = vsel %vm1442, %v1414, %v1055
      %v1448 = vsel %vm1442, %v1415, %v1057
      %v1449 = vsel %vm1442, %v1416, %v1059
      %v1450 = vsel %vm1442, %v1417, %v1061
      %v1451 = vsel %vm1442, %v1418, %v1063
      %v1452 = vsel %vm1442, %v1419, %v1065
      %v1453 = vsel %vm1442, %v1420, %v1067
      %v1454 = vsel %vm1442, %v1421, %v1069
      %v1455 = vsel %vm1442, %v1422, %v1071
      %v1456 = vsel %vm1442, %v1423, %v1073
      %v1457 = vsel %vm1442, %v1424, %v1075
      %v1458 = vsel %vm1442, %v1425, %v1077
      %v1459 = vsel %vm1442, %v1426, %v1079
      %v1460 = vsel %vm1442, %v1427, %v1081
      %v1461 = vsel %vm1442, %v1428, %v1083
      %v1462 = vsel %vm1442, %v1429, %v1085
      %v1463 = vsel %vm1442, %v1430, %v1087
      %v1464 = vsel %vm1442, %v1431, %v1089
      %v1465 = vsel %vm1442, %v1432, %v1091
      %v1466 = vsel %vm1442, %v1433, %v1093
      %v1467 = vsel %vm1442, %v1434, %v1095
      %v1468 = vsel %vm1442, %v1435, %v1097
      %v1469 = vsel %vm1442, %v1436, %v1099
      %v1470 = vsel %vm1442, %v1437, %v1101
      %v1471 = vsel %vm1442, %v1438, %v1103
      %v1472 = vsel %vm1442, %v1439, %v1105
      %v1473 = vsel %vm1442, %v1440, %v1107
      %v1474 = vsel %vm1442, %v1441, %v1109
      %vm1475 = vcmask 261120
      %v1476 = vsel %vm1475, %v1443, %v1149
      %v1477 = vsel %vm1475, %v1444, %v1151
      %v1478 = vsel %vm1475, %v1445, %v1153
      %v1479 = vsel %vm1475, %v1446, %v1155
      %v1480 = vsel %vm1475, %v1447, %v1157
      %v1481 = vsel %vm1475, %v1448, %v1159
      %v1482 = vsel %vm1475, %v1449, %v1161
      %v1483 = vsel %vm1475, %v1450, %v1163
      %v1484 = vsel %vm1475, %v1451, %v1165
      %v1485 = vsel %vm1475, %v1452, %v1167
      %v1486 = vsel %vm1475, %v1453, %v1169
      %v1487 = vsel %vm1475, %v1454, %v1171
      %v1488 = vsel %vm1475, %v1455, %v1173
      %v1489 = vsel %vm1475, %v1456, %v1175
      %v1490 = vsel %vm1475, %v1457, %v1177
      %v1491 = vsel %vm1475, %v1458, %v1179
      %v1492 = vsel %vm1475, %v1459, %v1181
      %v1493 = vsel %vm1475, %v1460, %v1183
      %v1494 = vsel %vm1475, %v1461, %v1185
      %v1495 = vsel %vm1475, %v1462, %v1187
      %v1496 = vsel %vm1475, %v1463, %v1189
      %v1497 = vsel %vm1475, %v1464, %v1191
      %v1498 = vsel %vm1475, %v1465, %v1193
      %v1499 = vsel %vm1475, %v1466, %v1195
      %v1500 = vsel %vm1475, %v1467, %v1197
      %v1501 = vsel %vm1475, %v1468, %v1199
      %v1502 = vsel %vm1475, %v1469, %v1201
      %v1503 = vsel %vm1475, %v1470, %v1203
      %v1504 = vsel %vm1475, %v1471, %v1205
      %v1505 = vsel %vm1475, %v1472, %v1207
      %v1506 = vsel %vm1475, %v1473, %v1209
      %v1507 = vsel %vm1475, %v1474, %v1211
      %v1508 = vld [vmem:[%s223] sm:$0xff]
      %v1509 = vld [vmem:[%s223 + $0x8] sm:$0xff]
      %v1510 = vld [vmem:[%s223 + $0x10] sm:$0xff]
      %v1511 = vld [vmem:[%s223 + $0x18] sm:$0xff]
      %v1512 = vld [vmem:[%s223 + $0x20] sm:$0xf]
      %v1513 = vld [vmem:[%s226] sm:$0x1]
      %v1515 = vperm.slane %v1513, 0
      %vm1517 = vcmask 293888
      %v1519 = vsel %vm1517, %v1476, 0
      %v1522 = vsel %vm1517, %v1477, 0
      %v1525 = vsel %vm1517, %v1478, 0
      %v1528 = vsel %vm1517, %v1479, 0
      %v1531 = vsel %vm1517, %v1480, 0
      %v1534 = vsel %vm1517, %v1481, 0
      %v1537 = vsel %vm1517, %v1482, 0
      %v1540 = vsel %vm1517, %v1483, 0
      %v1543 = vsel %vm1517, %v1484, 0
      %v1546 = vsel %vm1517, %v1485, 0
      %v1549 = vsel %vm1517, %v1486, 0
      %v1552 = vsel %vm1517, %v1487, 0
      %v1555 = vsel %vm1517, %v1488, 0
      %v1558 = vsel %vm1517, %v1489, 0
      %v1561 = vsel %vm1517, %v1490, 0
      %v1564 = vsel %vm1517, %v1491, 0
      %v1567 = vsel %vm1517, %v1492, 0
      %v1570 = vsel %vm1517, %v1493, 0
      %v1573 = vsel %vm1517, %v1494, 0
      %v1576 = vsel %vm1517, %v1495, 0
      %v1579 = vsel %vm1517, %v1496, 0
      %v1582 = vsel %vm1517, %v1497, 0
      %v1585 = vsel %vm1517, %v1498, 0
      %v1588 = vsel %vm1517, %v1499, 0
      %v1591 = vsel %vm1517, %v1500, 0
      %v1594 = vsel %vm1517, %v1501, 0
      %v1597 = vsel %vm1517, %v1502, 0
      %v1600 = vsel %vm1517, %v1503, 0
      %v1603 = vsel %vm1517, %v1504, 0
      %v1606 = vsel %vm1517, %v1505, 0
      %v1609 = vsel %vm1517, %v1506, 0
      %v1612 = vsel %vm1517, %v1507, 0
      %vm1614 = vcmask 1043456
      %v1616 = vsel %vm1614, %v1512, 0
      %1618 = vmatpush.msra.mxu0 0.0
      %1619 = vmatpush.msra.mxu0 0.0
      %1620 = vmatpush.msra.mxu0 0.0
      %1621 = vmatpush.msra.mxu0 0.0
      %1622 = vmatpush.msra.mxu0 0.0
      %1623 = vmatpush.msra.mxu0 0.0
      %1624 = vmatpush.msra.mxu0 0.0
      %1625 = vmatpush.msra.mxu0 0.0
      %1626 = vmatpush.msra.mxu0 0.0
      %1627 = vmatpush.msra.mxu0 0.0
      %1628 = vmatpush.msra.mxu0 0.0
      %1629 = vmatpush.msra.mxu0 %v1616
      %1630 = vmatpush.msra.mxu0 %v1511
      %1631 = vmatpush.msra.mxu0 %v1510
      %1632 = vmatpush.msra.mxu0 %v1509
      %1633 = vmatpush.msra.mxu0 %v1508
      %1634 = vmatmul.f32.gmra.mxu0 %v1519
      %v1635 = vpop.f32.mrf.mxu0
      %v1636 = vadd.f32 %v1515, %v1635
      %1637 = vmatmul.f32.gmra.mxu0 %v1522
      %v1638 = vpop.f32.mrf.mxu0
      %v1639 = vadd.f32 %v1515, %v1638
      %1640 = vmatmul.f32.gmra.mxu0 %v1525
      %v1641 = vpop.f32.mrf.mxu0
      %v1642 = vadd.f32 %v1515, %v1641
      %1643 = vmatmul.f32.gmra.mxu0 %v1528
      %v1644 = vpop.f32.mrf.mxu0
      %v1645 = vadd.f32 %v1515, %v1644
      %1646 = vmatmul.f32.gmra.mxu0 %v1531
      %v1647 = vpop.f32.mrf.mxu0
      %v1648 = vadd.f32 %v1515, %v1647
      %1649 = vmatmul.f32.gmra.mxu0 %v1534
      %v1650 = vpop.f32.mrf.mxu0
      %v1651 = vadd.f32 %v1515, %v1650
      %1652 = vmatmul.f32.gmra.mxu0 %v1537
      %v1653 = vpop.f32.mrf.mxu0
      %v1654 = vadd.f32 %v1515, %v1653
      %1655 = vmatmul.f32.gmra.mxu0 %v1540
      %v1656 = vpop.f32.mrf.mxu0
      %v1657 = vadd.f32 %v1515, %v1656
      %1658 = vmatmul.f32.gmra.mxu0 %v1543
      %v1659 = vpop.f32.mrf.mxu0
      %v1660 = vadd.f32 %v1515, %v1659
      %1661 = vmatmul.f32.gmra.mxu0 %v1546
      %v1662 = vpop.f32.mrf.mxu0
      %v1663 = vadd.f32 %v1515, %v1662
      %1664 = vmatmul.f32.gmra.mxu0 %v1549
      %v1665 = vpop.f32.mrf.mxu0
      %v1666 = vadd.f32 %v1515, %v1665
      %1667 = vmatmul.f32.gmra.mxu0 %v1552
      %v1668 = vpop.f32.mrf.mxu0
      %v1669 = vadd.f32 %v1515, %v1668
      %1670 = vmatmul.f32.gmra.mxu0 %v1555
      %v1671 = vpop.f32.mrf.mxu0
      %v1672 = vadd.f32 %v1515, %v1671
      %1673 = vmatmul.f32.gmra.mxu0 %v1558
      %v1674 = vpop.f32.mrf.mxu0
      %v1675 = vadd.f32 %v1515, %v1674
      %1676 = vmatmul.f32.gmra.mxu0 %v1561
      %v1677 = vpop.f32.mrf.mxu0
      %v1678 = vadd.f32 %v1515, %v1677
      %1679 = vmatmul.f32.gmra.mxu0 %v1564
      %v1680 = vpop.f32.mrf.mxu0
      %v1681 = vadd.f32 %v1515, %v1680
      %1682 = vmatmul.f32.gmra.mxu0 %v1567
      %v1683 = vpop.f32.mrf.mxu0
      %v1684 = vadd.f32 %v1515, %v1683
      %1685 = vmatmul.f32.gmra.mxu0 %v1570
      %v1686 = vpop.f32.mrf.mxu0
      %v1687 = vadd.f32 %v1515, %v1686
      %1688 = vmatmul.f32.gmra.mxu0 %v1573
      %v1689 = vpop.f32.mrf.mxu0
      %v1690 = vadd.f32 %v1515, %v1689
      %1691 = vmatmul.f32.gmra.mxu0 %v1576
      %v1692 = vpop.f32.mrf.mxu0
      %v1693 = vadd.f32 %v1515, %v1692
      %1694 = vmatmul.f32.gmra.mxu0 %v1579
      %v1695 = vpop.f32.mrf.mxu0
      %v1696 = vadd.f32 %v1515, %v1695
      %1697 = vmatmul.f32.gmra.mxu0 %v1582
      %v1698 = vpop.f32.mrf.mxu0
      %v1699 = vadd.f32 %v1515, %v1698
      %1700 = vmatmul.f32.gmra.mxu0 %v1585
      %v1701 = vpop.f32.mrf.mxu0
      %v1702 = vadd.f32 %v1515, %v1701
      %1703 = vmatmul.f32.gmra.mxu0 %v1588
      %v1704 = vpop.f32.mrf.mxu0
      %v1705 = vadd.f32 %v1515, %v1704
      %1706 = vmatmul.f32.gmra.mxu0 %v1591
      %v1707 = vpop.f32.mrf.mxu0
      %v1708 = vadd.f32 %v1515, %v1707
      %1709 = vmatmul.f32.gmra.mxu0 %v1594
      %v1710 = vpop.f32.mrf.mxu0
      %v1711 = vadd.f32 %v1515, %v1710
      %1712 = vmatmul.f32.gmra.mxu0 %v1597
      %v1713 = vpop.f32.mrf.mxu0
      %v1714 = vadd.f32 %v1515, %v1713
      %1715 = vmatmul.f32.gmra.mxu0 %v1600
      %v1716 = vpop.f32.mrf.mxu0
      %v1717 = vadd.f32 %v1515, %v1716
      %1718 = vmatmul.f32.gmra.mxu0 %v1603
      %v1719 = vpop.f32.mrf.mxu0
      %v1720 = vadd.f32 %v1515, %v1719
      %1721 = vmatmul.f32.gmra.mxu0 %v1606
      %v1722 = vpop.f32.mrf.mxu0
      %v1723 = vadd.f32 %v1515, %v1722
      %1724 = vmatmul.f32.gmra.mxu0 %v1609
      %v1725 = vpop.f32.mrf.mxu0
      %v1726 = vadd.f32 %v1515, %v1725
      %1727 = vmatmul.f32.gmra.mxu0 %v1612
      %v1728 = vpop.f32.mrf.mxu0
      %v1729 = vadd.f32 %v1515, %v1728
      %1730 = vdwg.mxu0
      %v1731 = vmax.f32 %v1636, 0.0
      %v1732 = vmax.f32 %v1639, 0.0
      %v1733 = vmax.f32 %v1642, 0.0
      %v1734 = vmax.f32 %v1645, 0.0
      %v1735 = vmax.f32 %v1648, 0.0
      %v1736 = vmax.f32 %v1651, 0.0
      %v1737 = vmax.f32 %v1654, 0.0
      %v1738 = vmax.f32 %v1657, 0.0
      %v1739 = vmax.f32 %v1660, 0.0
      %v1740 = vmax.f32 %v1663, 0.0
      %v1741 = vmax.f32 %v1666, 0.0
      %v1742 = vmax.f32 %v1669, 0.0
      %v1743 = vmax.f32 %v1672, 0.0
      %v1744 = vmax.f32 %v1675, 0.0
      %v1745 = vmax.f32 %v1678, 0.0
      %v1746 = vmax.f32 %v1681, 0.0
      %v1747 = vmax.f32 %v1684, 0.0
      %v1748 = vmax.f32 %v1687, 0.0
      %v1749 = vmax.f32 %v1690, 0.0
      %v1750 = vmax.f32 %v1693, 0.0
      %v1751 = vmax.f32 %v1696, 0.0
      %v1752 = vmax.f32 %v1699, 0.0
      %v1753 = vmax.f32 %v1702, 0.0
      %v1754 = vmax.f32 %v1705, 0.0
      %v1755 = vmax.f32 %v1708, 0.0
      %v1756 = vmax.f32 %v1711, 0.0
      %v1757 = vmax.f32 %v1714, 0.0
      %v1758 = vmax.f32 %v1717, 0.0
      %v1759 = vmax.f32 %v1720, 0.0
      %v1760 = vmax.f32 %v1723, 0.0
      %v1761 = vmax.f32 %v1726, 0.0
      %v1762 = vmax.f32 %v1729, 0.0
      %1763 = vst.msk [vmem:[%s238] sm:$0xff] %vm1277, %v1731
      %1764 = vst.msk [vmem:[%s238 + $0x8] sm:$0xff] %vm1277, %v1732
      %1765 = vst.msk [vmem:[%s238 + $0x10] sm:$0xff] %vm1277, %v1733
      %1766 = vst.msk [vmem:[%s238 + $0x18] sm:$0xff] %vm1277, %v1734
      %1767 = vst.msk [vmem:[%s238 + $0x20] sm:$0xff] %vm1277, %v1735
      %1768 = vst.msk [vmem:[%s238 + $0x28] sm:$0xff] %vm1277, %v1736
      %1769 = vst.msk [vmem:[%s238 + $0x30] sm:$0xff] %vm1277, %v1737
      %1770 = vst.msk [vmem:[%s238 + $0x38] sm:$0xff] %vm1277, %v1738
      %1771 = vst.msk [vmem:[%s238 + $0x40] sm:$0xff] %vm1277, %v1739
      %1772 = vst.msk [vmem:[%s238 + $0x48] sm:$0xff] %vm1277, %v1740
      %1773 = vst.msk [vmem:[%s238 + $0x50] sm:$0xff] %vm1277, %v1741
      %1774 = vst.msk [vmem:[%s238 + $0x58] sm:$0xff] %vm1277, %v1742
      %1775 = vst.msk [vmem:[%s238 + $0x60] sm:$0xff] %vm1277, %v1743
      %1776 = vst.msk [vmem:[%s238 + $0x68] sm:$0xff] %vm1277, %v1744
      %1777 = vst.msk [vmem:[%s238 + $0x70] sm:$0xff] %vm1277, %v1745
      %1778 = vst.msk [vmem:[%s238 + $0x78] sm:$0xff] %vm1277, %v1746
      %1779 = vst.msk [vmem:[%s238 + $0x80] sm:$0xff] %vm1277, %v1747
      %1780 = vst.msk [vmem:[%s238 + $0x88] sm:$0xff] %vm1277, %v1748
      %1781 = vst.msk [vmem:[%s238 + $0x90] sm:$0xff] %vm1277, %v1749
      %1782 = vst.msk [vmem:[%s238 + $0x98] sm:$0xff] %vm1277, %v1750
      %1783 = vst.msk [vmem:[%s238 + $0xa0] sm:$0xff] %vm1277, %v1751
      %1784 = vst.msk [vmem:[%s238 + $0xa8] sm:$0xff] %vm1277, %v1752
      %1785 = vst.msk [vmem:[%s238 + $0xb0] sm:$0xff] %vm1277, %v1753
      %1786 = vst.msk [vmem:[%s238 + $0xb8] sm:$0xff] %vm1277, %v1754
      %1787 = vst.msk [vmem:[%s238 + $0xc0] sm:$0xff] %vm1277, %v1755
      %1788 = vst.msk [vmem:[%s238 + $0xc8] sm:$0xff] %vm1277, %v1756
      %1789 = vst.msk [vmem:[%s238 + $0xd0] sm:$0xff] %vm1277, %v1757
      %1790 = vst.msk [vmem:[%s238 + $0xd8] sm:$0xff] %vm1277, %v1758
      %1791 = vst.msk [vmem:[%s238 + $0xe0] sm:$0xff] %vm1277, %v1759
      %1792 = vst.msk [vmem:[%s238 + $0xe8] sm:$0xff] %vm1277, %v1760
      %1793 = vst.msk [vmem:[%s238 + $0xf0] sm:$0xff] %vm1277, %v1761
      %1794 = vst.msk [vmem:[%s238 + $0xf8] sm:$0xff] %vm1277, %v1762
      %s1795 = smul.u32 32, %s21
      %p1796 = scmp.lt.s32.totalorder %s19, 1
      %s1797 = scalar_select %p1796, %s19, 1
      %p1798 = scmp.lt.s32.totalorder %s1795, 63
      %s1799 = scalar_select %p1798, %s1795, 63
      %p1800 = scmp.lt.s32.totalorder %s20, 0
      %s1801 = scalar_select %p1800, %s20, 0
      %s1802 = sadd.s32 %s1801, %s1799
      %s1803 = smul.addr %s1797, 64
      %s1804 = sadd.s32 %s1802, %s1803
      %s1805 = smul.addr %s1804, 8
      %s1806 = scalar_lea.vmem %s3, %s1805
      // Predicated region
      $region33: #{tpu_custom_call.1} parent=31 // pred_check
        %p1807 = pneg %p133
      $region34: #{tpu_custom_call.1} parent=31 // pred_check_branch
        %1809 = sbr.rel (%p1807) target = $region36
      $region35: #{tpu_custom_call.1} parent=31 // pred_region
        %s1810 = smul.u32 32, %s21
      $region36: #{tpu_custom_call.1} parent=31 // pred_fallthru
        _
    $region32: #{tpu_custom_call.1} parent=5 // pred_fallthru
      _
    %p1811 = scmp.le.s32.totalorder 2, %s9
    // Predicated region
    $region37: #{tpu_custom_call.1} parent=5 // pred_check
      %p1812 = pneg %p1811
    $region38: #{tpu_custom_call.1} parent=5 // pred_check_branch
      %1814 = sbr.rel (%p1812) target = $region40
    $region39: #{tpu_custom_call.1} parent=5 // pred_region
      %s1815 = ssub.s32 %s9, 2
      // Predicated region
      $region41: #{tpu_custom_call.1} parent=39 // pred_check
        %p1816 = pneg %p139
      $region42: #{tpu_custom_call.1} parent=39 // pred_check_branch
        %1818 = sbr.rel (%p1816) target = $region44
      $region43: #{tpu_custom_call.1} parent=39 // pred_region
        %s1819 = smul.u32 32, %s24
        %p1820 = scmp.lt.s32.totalorder %s22, 1
        %s1821 = scalar_select %p1820, %s22, 1
        %p1822 = scmp.lt.s32.totalorder %s1819, 63
        %s1823 = scalar_select %p1822, %s1819, 63
        %p1824 = scmp.lt.s32.totalorder %s23, 0
        %s1825 = scalar_select %p1824, %s23, 0
        %s1826 = sadd.s32 %s1825, %s1823
        %s1827 = smul.addr %s1821, 64
        %s1828 = sadd.s32 %s1826, %s1827
        %s1829 = smul.addr %s1828, 8
        %s1830 = scalar_lea.vmem %s3, %s1829
      $region44: #{tpu_custom_call.1} parent=39 // pred_fallthru
        _
    $region40: #{tpu_custom_call.1} parent=5 // pred_fallthru
      _
  $region6: #{tpu_custom_call.1} parent=0 // loop_footer
    %s13 = sadd.s32 1, %s9
  $region7: #{tpu_custom_call.1} parent=0 // loop_footer_branch
    %8 = sbr.rel target = $region3
  $region8: #{tpu_custom_call.1} parent=0 // loop_exit
    _

</llo_original>
